<compile_context>
chip_gen: v7x
topology: tpu7x:2x2x1
jax: 0.10.0
libtpu: 0.0.40
codegen_flags: <defaults>
</compile_context>

<pallas_src>
import functools
import math

import numpy as np
import jax
import jax.numpy as jnp
from jax import lax
from jax.experimental import pallas as pl
from jax.experimental.pallas import tpu as pltpu


def _round_up(v, m):
    return (v + m - 1) // m * m


def _ln(x, g, b, eps=1e-6):
    mu = jnp.mean(x, axis=-1, keepdims=True)
    var = jnp.mean((x - mu) ** 2, axis=-1, keepdims=True)
    return (x - mu) * lax.rsqrt(var + eps) * g + b


def visual_head_kernel(x_ref, w_fc1, b_fc1, pe_ref,
                       ln1_g, ln1_b, w_c1, b_c1, w_c2, b_c2,
                       ln2_g, ln2_b, w_out, b_out,
                       feat_ref, featn_ref, logits_ref, probs_ref,
                       *, seq_len, pad_len):
    N = x_ref.shape[0]                     # block_b * pad_len packed rows
    Bb = N // pad_len
    H = w_fc1.shape[1]

    # fc1 (eval-mode SyncBatchNorm folded into W/b in the wrapper) + ReLU + pos-enc.
    # MXU inputs are bf16, accumulation is f32.
    h = jnp.dot(x_ref[...], w_fc1[...],
                preferred_element_type=jnp.float32) + b_fc1[...]
    h = jnp.maximum(h, 0.0)
    # pe is (pad_len, H); add through a free (Bb, pad_len, H) view (pad_len % 8 == 0).
    h = (h.reshape(Bb, pad_len, H) + pe_ref[...][None]).reshape(N, H)
    # TODO(synk): dropout1 / feedforward dropouts are identity (eval-mode semantics).

    # Sequence-boundary masks for the k=3 'same' conv shifts; they also keep packed
    # batch elements (and padded time rows) from leaking into each other.
    row = lax.broadcasted_iota(jnp.int32, (N, 1), 0)
    t = row % pad_len
    no_prev = t == 0                       # row has no x[t-1]
    no_next = t == seq_len - 1             # row has no valid x[t+1]

    # PositionwiseFeedForward: LN -> Conv1d(k=3,'same') -> ReLU -> Conv1d -> +skip.
    hn = _ln(h, ln1_g[...], ln1_b[...])
    h_prev = jnp.where(no_prev, 0.0, pltpu.roll(hn, 1, axis=0)).astype(jnp.bfloat16)
    h_next = jnp.where(no_next, 0.0, pltpu.roll(hn, N - 1, axis=0)).astype(jnp.bfloat16)
    # Fused first conv: one (N, 3H) x (3H, FF) dot (taps accumulate inside the MXU).
    lhs = jnp.concatenate([h_prev, hn.astype(jnp.bfloat16), h_next], axis=-1)
    f = jnp.dot(lhs, w_c1[...], preferred_element_type=jnp.float32) + b_c1[...]
    f16 = jnp.maximum(f, 0.0).astype(jnp.bfloat16)

    # Fused second conv: one (N, FF) x (FF, 3H) dot, then roll/mask/add the three
    # H-wide lane slices of the result.
    d = jnp.dot(f16, w_c2[...], preferred_element_type=jnp.float32)
    g = (jnp.where(no_prev, 0.0, pltpu.roll(d[:, :H], 1, axis=0))
         + d[:, H:2 * H]
         + jnp.where(no_next, 0.0, pltpu.roll(d[:, 2 * H:], N - 1, axis=0))
         + b_c2[...])
    h = g + h                              # skip connection

    # Final LayerNorm -> gloss_feature / gloss_feature_norm (F.normalize, dim=-1).
    y = _ln(h, ln2_g[...], ln2_b[...])
    feat_ref[...] = y
    inv_nrm = lax.rsqrt(jnp.maximum(jnp.sum(y * y, axis=-1, keepdims=True), 1e-24))
    featn_ref[...] = y * inv_nrm

    # gloss_output_layer: the time-mean commutes with the Linear layer, so project the
    # (Bb, H) per-sequence mean instead of the full (N, H) slab.  Padded time rows are
    # masked out of the mean; the divisor is the real sequence length.
    if seq_len == pad_len:
        y_sum = jnp.sum(y.reshape(Bb, pad_len, H), axis=1)
    else:
        valid = (t < seq_len).astype(jnp.float32)
        y_sum = jnp.sum((y * valid).reshape(Bb, pad_len, H), axis=1)
    y_mean = y_sum * (1.0 / seq_len)
    logits = jnp.dot(y_mean.astype(jnp.bfloat16), w_out[...],
                     preferred_element_type=jnp.float32) + b_out[...]
    logits_ref[...] = logits[None]                       # (1, Bb, C_pad), lane-dense
    m = jnp.max(logits, axis=-1, keepdims=True)
    e = jnp.exp(logits - m)
    probs_ref[...] = (e / jnp.sum(e, axis=-1, keepdims=True))[None]


def _vmem_capacity_bytes():
    """Per-core VMEM capacity; conservative 64 MiB (v7x) fallback if unavailable."""
    try:
        return int(pltpu.get_tpu_info().vmem_capacity_bytes)
    except Exception:
        return 64 << 20


def _vmem_estimate_bytes(rows, d_in, hidden, ff, cls, t_pad):
    """Rough per-step live-set estimate (resident bf16 weights + pipelined IO + f32 temps)."""
    f32, bf16 = 4, 2
    weights = bf16 * (d_in * hidden + 6 * hidden * ff + hidden * cls)   # single-buffered
    params = f32 * (6 * hidden + ff + 2 * cls + t_pad * hidden)
    io = (2 * bf16 * rows * d_in                # x rows, double-buffered
          + 2 * 2 * f32 * rows * hidden         # feat + featn, double-buffered
          + 2 * 2 * f32 * 8 * cls)              # logits + probs (tiny)
    live = f32 * rows * (6 * hidden + 2 * ff) + bf16 * rows * (3 * hidden + ff)
    return weights + params + io + live


def _pick_block_b(batch, t_pad, d_in, hidden, ff, cls, cap, target_rows):
    """Pack batch elements per grid step; keep >=2 grid steps and fit the VMEM cap."""
    bb = max(1, target_rows // t_pad)
    bb = min(bb, batch)
    if batch >= 2:
        bb = min(bb, max(1, (batch + 1) // 2))   # >= 2 steps so both v7x TCs get work
    while bb > 1 and _vmem_estimate_bytes(bb * t_pad, d_in, hidden, ff, cls, t_pad) > cap:
        bb -= 1
    return bb


def visual_head_forward(x, p, *, block_b=None):
    # (B, D, T, H, W) -> spatial mean (f32 accumulate) -> (B, T, D).
    if x.ndim > 3:
        x = jnp.mean(x, axis=(-2, -1), dtype=jnp.float32)    # (B, D, T)
        x = jnp.swapaxes(x, 1, 2)                             # (B, T, D)
    B, T, Din = x.shape

    H = p["w_fc1"].shape[1]
    FF = p["w_c1"].shape[2]
    C = p["w_out"].shape[1]

    Din_p = _round_up(Din, 128)          # lane/K alignment for the fc1 matmul
    C_p = _round_up(C, 128)              # lane-dense logits/probs stores
    T_p = _round_up(T, 8)                # clean (8,128) tiles for in-kernel reshapes

    cap = max(32 << 20, _vmem_capacity_bytes() - (16 << 20))   # leave Mosaic headroom
    target_rows = 512 if cap >= (96 << 20) else 256            # bigger blocks on v5e/v6e
    if block_b is None:
        block_b = _pick_block_b(B, T_p, Din_p, H, FF, C_p, cap, target_rows)
    nblk = -(-B // block_b)
    B_p = nblk * block_b                 # pad batch instead of a giant single block
    N = block_b * T_p

    # Pooled activations -> bf16 packed rows (padded B / T / D sliced off after).
    x2d = jnp.pad(x, ((0, B_p - B), (0, T_p - T), (0, Din_p - Din))
                  ).astype(jnp.bfloat16).reshape(B_p * T_p, Din_p)

    # Fold eval-mode BatchNorm into fc1; fuse conv taps along K/N; bf16 MXU weights.
    w_fc1 = jnp.pad(p["w_fc1"] * p["bn_scale"],
                    ((0, Din_p - Din), (0, 0))).astype(jnp.bfloat16)
    b_fc1 = p["b_fc1"] * p["bn_scale"] + p["bn_shift"]
    w_c1 = p["w_c1"].reshape(3 * H, FF).astype(jnp.bfloat16)                   # (3H, FF)
    w_c2 = jnp.transpose(p["w_c2"], (1, 0, 2)).reshape(FF, 3 * H).astype(jnp.bfloat16)
    w_out = jnp.pad(p["w_out"], ((0, 0), (0, C_p - C))).astype(jnp.bfloat16)
    b_out = jnp.pad(p["b_out"], ((0, 0), (0, C_p - C)), constant_values=-1e30)
    pe = jnp.pad(p["pe"][:T], ((0, T_p - T), (0, 0)))                          # (T_p, H)

    est = _vmem_estimate_bytes(N, Din_p, H, FF, C_p, T_p)
    vmem_limit = int(min(cap, max(32 << 20, int(1.25 * est) + (4 << 20))))

    single = dict(pipeline_mode=pl.Buffered(1))           # constant index_map -> 1 buffer
    c2 = lambda i: (0, 0)
    in_specs = [
        pl.BlockSpec((N, Din_p), lambda i: (i, 0)),       # x rows (double-buffered)
        pl.BlockSpec((Din_p, H), c2, **single),           # w_fc1 (BN folded, bf16)
        pl.BlockSpec((1, H), c2, **single),               # b_fc1 (BN folded)
        pl.BlockSpec((T_p, H), c2, **single),             # pe (per-sequence, not tiled)
        pl.BlockSpec((1, H), c2, **single),               # ln1_g
        pl.BlockSpec((1, H), c2, **single),               # ln1_b
        pl.BlockSpec((3 * H, FF), c2, **single),          # w_c1 fused (bf16)
        pl.BlockSpec((1, FF), c2, **single),              # b_c1
        pl.BlockSpec((FF, 3 * H), c2, **single),          # w_c2 fused (bf16)
        pl.BlockSpec((1, H), c2, **single),               # b_c2
        pl.BlockSpec((1, H), c2, **single),               # ln2_g
        pl.BlockSpec((1, H), c2, **single),               # ln2_b
        pl.BlockSpec((H, C_p), c2, **single),             # w_out (bf16, C padded)
        pl.BlockSpec((1, C_p), c2, **single),             # b_out (-1e30 on padded cls)
    ]
    out_specs = [
        pl.BlockSpec((N, H), lambda i: (i, 0)),           # gloss_feature (packed rows)
        pl.BlockSpec((N, H), lambda i: (i, 0)),           # gloss_feature_norm
        pl.BlockSpec((1, block_b, C_p), lambda i: (i, 0, 0)),  # gloss_logits
        pl.BlockSpec((1, block_b, C_p), lambda i: (i, 0, 0)),  # gloss_probabilities
    ]
    out_shape = (
        jax.ShapeDtypeStruct((B_p * T_p, H), jnp.float32),
        jax.ShapeDtypeStruct((B_p * T_p, H), jnp.float32),
        jax.ShapeDtypeStruct((nblk, block_b, C_p), jnp.float32),
        jax.ShapeDtypeStruct((nblk, block_b, C_p), jnp.float32),
    )

    kernel = functools.partial(visual_head_kernel, seq_len=T, pad_len=T_p)
    feat, featn, logits, probs = pl.pallas_call(
        kernel,
        out_shape=out_shape,
        grid_spec=pltpu.PrefetchScalarGridSpec(
            num_scalar_prefetch=0, grid=(nblk,),
            in_specs=in_specs, out_specs=out_specs),
        compiler_params=pltpu.CompilerParams(
            dimension_semantics=("parallel",),
            vmem_limit_bytes=vmem_limit),
    )(x2d, w_fc1, b_fc1, pe,
      p["ln1_g"], p["ln1_b"], w_c1, p["b_c1"], w_c2, p["b_c2"],
      p["ln2_g"], p["ln2_b"], w_out, b_out)

    return {
        "gloss_feature": feat.reshape(B_p, T_p, H)[:B, :T],
        "gloss_feature_norm": featn.reshape(B_p, T_p, H)[:B, :T],
        "gloss_logits": logits.reshape(B_p, C_p)[:B, :C],
        "gloss_probabilities": probs.reshape(B_p, C_p)[:B, :C],
    }


def make_params(key, *, input_size, hidden_size, ff_size, cls_num, max_len):
    ks = jax.random.split(key, 16)
    s = 0.05
    nrm = lambda k, shape: jax.random.normal(k, shape, jnp.float32) * s

    w_fc1 = nrm(ks[0], (input_size, hidden_size))
    b_fc1 = nrm(ks[1], (1, hidden_size))

    # SyncBatchNorm (eval): fold gamma/beta/running stats into scale & shift
    bn_gamma = 1.0 + nrm(ks[2], (1, hidden_size))
    bn_beta = nrm(ks[3], (1, hidden_size))
    bn_mean = nrm(ks[4], (1, hidden_size))
    bn_var = 1.0 + jnp.abs(nrm(ks[5], (1, hidden_size)))
    bn_scale = bn_gamma / jnp.sqrt(bn_var + 1e-5)
    bn_shift = bn_beta - bn_mean * bn_scale

    ln1_g = 1.0 + nrm(ks[6], (1, hidden_size))
    ln1_b = nrm(ks[7], (1, hidden_size))
    # Conv1d weights: torch shape (out, in, k) pre-transposed to (k, in, out)
    w_c1 = nrm(ks[8], (3, hidden_size, ff_size))
    b_c1 = nrm(ks[9], (1, ff_size))
    w_c2 = nrm(ks[10], (3, ff_size, hidden_size))
    b_c2 = nrm(ks[11], (1, hidden_size))
    ln2_g = 1.0 + nrm(ks[12], (1, hidden_size))
    ln2_b = nrm(ks[13], (1, hidden_size))
    w_out = nrm(ks[14], (hidden_size, cls_num))
    b_out = nrm(ks[15], (1, cls_num))

    # sinusoidal PositionalEncoding
    pos = jnp.arange(max_len, dtype=jnp.float32)[:, None]
    div = jnp.exp(jnp.arange(0, hidden_size, 2, dtype=jnp.float32)
                  * -(math.log(10000.0) / hidden_size))
    pe = jnp.zeros((max_len, hidden_size), jnp.float32)
    pe = pe.at[:, 0::2].set(jnp.sin(pos * div))
    pe = pe.at[:, 1::2].set(jnp.cos(pos * div))

    return dict(w_fc1=w_fc1, b_fc1=b_fc1, bn_scale=bn_scale, bn_shift=bn_shift, pe=pe,
                ln1_g=ln1_g, ln1_b=ln1_b, w_c1=w_c1, b_c1=b_c1, w_c2=w_c2, b_c2=b_c2,
                ln2_g=ln2_g, ln2_b=ln2_b, w_out=w_out, b_out=b_out)


def reference_forward(x, p):
    """Pure-JAX f32 reference with identical (eval-mode) semantics."""
    if x.ndim > 3:
        x = jnp.mean(x, axis=(-2, -1)).transpose(0, 2, 1)
    x = x.astype(jnp.float32)
    T = x.shape[1]

    def ln(v, g, b):
        mu = jnp.mean(v, axis=-1, keepdims=True)
        var = jnp.mean((v - mu) ** 2, axis=-1, keepdims=True)
        return (v - mu) / jnp.sqrt(var + 1e-6) * g + b

    h = x @ p["w_fc1"] + p["b_fc1"]
    h = h * p["bn_scale"] + p["bn_shift"]
    h = jnp.maximum(h, 0.0)
    h = h + p["pe"][None, :T]

    hn = ln(h, p["ln1_g"], p["ln1_b"])
    pad = lambda v: jnp.pad(v, ((0, 0), (1, 1), (0, 0)))
    hp = pad(hn)
    f = (hp[:, :-2] @ p["w_c1"][0] + hp[:, 1:-1] @ p["w_c1"][1]
         + hp[:, 2:] @ p["w_c1"][2]) + p["b_c1"]
    f = jnp.maximum(f, 0.0)
    fp = pad(f)
    g = (fp[:, :-2] @ p["w_c2"][0] + fp[:, 1:-1] @ p["w_c2"][1]
         + fp[:, 2:] @ p["w_c2"][2]) + p["b_c2"]
    h = g + h

    y = ln(h, p["ln2_g"], p["ln2_b"])
    yn = y / jnp.maximum(jnp.sqrt(jnp.sum(y * y, -1, keepdims=True)), 1e-12)
    logits = jnp.mean(y @ p["w_out"] + p["b_out"], axis=1)
    probs = jax.nn.softmax(logits, axis=-1)
    return y, yn, logits, probs


if __name__ == "__main__":
    # small shapes: B=2, input_size(D)=32, T=8, spatial 4x4, hidden=32, ff=64, cls=16
    B, Din, T, Hs, Ws = 2, 32, 8, 4, 4
    hidden, ff, cls = 32, 64, 16

    key = jax.random.PRNGKey(0)
    kx, kp = jax.random.split(key)
    x = jax.random.normal(kx, (B, Din, T, Hs, Ws), jnp.float32)
    params = make_params(kp, input_size=Din, hidden_size=hidden,
                         ff_size=ff, cls_num=cls, max_len=T)

    out = visual_head_forward(x, params)
    jax.block_until_ready(out)

    ref_feat, ref_featn, ref_logits, ref_probs = reference_forward(x, params)
    # bf16 MXU inputs -> compare against the f32 reference with bf16-appropriate tolerances.
    tol = dict(rtol=2e-2, atol=2e-2)
    np.testing.assert_allclose(np.asarray(out["gloss_feature"]), np.asarray(ref_feat), **tol)
    np.testing.assert_allclose(np.asarray(out["gloss_feature_norm"]), np.asarray(ref_featn), **tol)
    np.testing.assert_allclose(np.asarray(out["gloss_logits"]), np.asarray(ref_logits), **tol)
    np.testing.assert_allclose(np.asarray(out["gloss_probabilities"]), np.asarray(ref_probs), **tol)
    print("KERNEL_OK")
</pallas_src>

<mosaic_0001>
module attributes {stable_mosaic.version = 11 : i64} {
  func.func @visual_head_kernel(%arg0: i32, %arg1: memref<8x128xbf16, #tpu.memory_space<vmem>>, %arg2: memref<128x32xbf16, #tpu.memory_space<vmem>>, %arg3: memref<1x32xf32, #tpu.memory_space<vmem>>, %arg4: memref<8x32xf32, #tpu.memory_space<vmem>>, %arg5: memref<1x32xf32, #tpu.memory_space<vmem>>, %arg6: memref<1x32xf32, #tpu.memory_space<vmem>>, %arg7: memref<96x64xbf16, #tpu.memory_space<vmem>>, %arg8: memref<1x64xf32, #tpu.memory_space<vmem>>, %arg9: memref<64x96xbf16, #tpu.memory_space<vmem>>, %arg10: memref<1x32xf32, #tpu.memory_space<vmem>>, %arg11: memref<1x32xf32, #tpu.memory_space<vmem>>, %arg12: memref<1x32xf32, #tpu.memory_space<vmem>>, %arg13: memref<32x128xbf16, #tpu.memory_space<vmem>>, %arg14: memref<1x128xf32, #tpu.memory_space<vmem>>, %arg15: memref<8x32xf32, #tpu.memory_space<vmem>>, %arg16: memref<8x32xf32, #tpu.memory_space<vmem>>, %arg17: memref<1x1x128xf32, #tpu.memory_space<vmem>>, %arg18: memref<1x1x128xf32, #tpu.memory_space<vmem>>) attributes {dimension_semantics = [#tpu.dimension_semantics<parallel>], iteration_bounds = array<i64: 2>, scalar_prefetch = 0 : i64, scratch_operands = 0 : i64, tpu.core_type = #tpu.core_type<tc>, window_params = [{transform_indices = @transform_0, window_bounds = array<i64: 8, 128>}, {pipeline_mode = #tpu.pipeline_mode<synchronous>, transform_indices = @transform_1, window_bounds = array<i64: 128, 32>}, {pipeline_mode = #tpu.pipeline_mode<synchronous>, transform_indices = @transform_2, window_bounds = array<i64: 1, 32>}, {pipeline_mode = #tpu.pipeline_mode<synchronous>, transform_indices = @transform_3, window_bounds = array<i64: 8, 32>}, {pipeline_mode = #tpu.pipeline_mode<synchronous>, transform_indices = @transform_4, window_bounds = array<i64: 1, 32>}, {pipeline_mode = #tpu.pipeline_mode<synchronous>, transform_indices = @transform_5, window_bounds = array<i64: 1, 32>}, {pipeline_mode = #tpu.pipeline_mode<synchronous>, transform_indices = @transform_6, window_bounds = array<i64: 96, 64>}, {pipeline_mode = #tpu.pipeline_mode<synchronous>, transform_indices = @transform_7, window_bounds = array<i64: 1, 64>}, {pipeline_mode = #tpu.pipeline_mode<synchronous>, transform_indices = @transform_8, window_bounds = array<i64: 64, 96>}, {pipeline_mode = #tpu.pipeline_mode<synchronous>, transform_indices = @transform_9, window_bounds = array<i64: 1, 32>}, {pipeline_mode = #tpu.pipeline_mode<synchronous>, transform_indices = @transform_10, window_bounds = array<i64: 1, 32>}, {pipeline_mode = #tpu.pipeline_mode<synchronous>, transform_indices = @transform_11, window_bounds = array<i64: 1, 32>}, {pipeline_mode = #tpu.pipeline_mode<synchronous>, transform_indices = @transform_12, window_bounds = array<i64: 32, 128>}, {pipeline_mode = #tpu.pipeline_mode<synchronous>, transform_indices = @transform_13, window_bounds = array<i64: 1, 128>}, {transform_indices = @transform_14, window_bounds = array<i64: 8, 32>}, {transform_indices = @transform_15, window_bounds = array<i64: 8, 32>}, {transform_indices = @transform_16, window_bounds = array<i64: 1, 1, 128>}, {transform_indices = @transform_17, window_bounds = array<i64: 1, 1, 128>}]} {
    %c0 = arith.constant 0 : index
    %c0_0 = arith.constant 0 : index
    %0 = vector.load %arg1[%c0, %c0_0] : memref<8x128xbf16, #tpu.memory_space<vmem>>, vector<8x128xbf16>
    %c0_1 = arith.constant 0 : index
    %c0_2 = arith.constant 0 : index
    %1 = vector.load %arg2[%c0_1, %c0_2] : memref<128x32xbf16, #tpu.memory_space<vmem>>, vector<128x32xbf16>
    %cst = arith.constant dense<0.000000e+00> : vector<8x32xf32>
    %2 = tpu.matmul %0, %1, %cst {dimension_numbers = #tpu.dot_dimension_numbers<[1], [0], [0], [1], [0, 0, 1, 1], [], []>} : vector<8x128xbf16>, vector<128x32xbf16>, vector<8x32xf32> -> vector<8x32xf32>
    %c0_3 = arith.constant 0 : index
    %c0_4 = arith.constant 0 : index
    %3 = vector.load %arg3[%c0_3, %c0_4] : memref<1x32xf32, #tpu.memory_space<vmem>>, vector<1x32xf32>
    %4 = vector.broadcast %3 : vector<1x32xf32> to vector<8x32xf32>
    %5 = arith.addf %2, %4 : vector<8x32xf32>
    %cst_5 = arith.constant 0.000000e+00 : f32
    %6 = vector.broadcast %cst_5 : f32 to vector<8x32xf32>
    %7 = arith.maximumf %5, %6 : vector<8x32xf32>
    %8 = vector.shape_cast %7 : vector<8x32xf32> to vector<1x8x32xf32>
    %c0_6 = arith.constant 0 : index
    %c0_7 = arith.constant 0 : index
    %9 = vector.load %arg4[%c0_6, %c0_7] : memref<8x32xf32, #tpu.memory_space<vmem>>, vector<8x32xf32>
    %10 = vector.shape_cast %9 : vector<8x32xf32> to vector<1x8x32xf32>
    %11 = arith.addf %8, %10 : vector<1x8x32xf32>
    %12 = vector.shape_cast %11 : vector<1x8x32xf32> to vector<8x32xf32>
    %13 = tpu.iota {dimensions = array<i32: 0>} : vector<8x1xi32>
    %c8_i32 = arith.constant 8 : i32
    %c0_i32 = arith.constant 0 : i32
    %14 = arith.cmpi eq, %c8_i32, %c0_i32 : i32
    %c1_i32 = arith.constant 1 : i32
    %15 = arith.select %14, %c1_i32, %c8_i32 : i32
    %16 = vector.broadcast %15 : i32 to vector<8x1xi32>
    %17 = arith.remsi %13, %16 : vector<8x1xi32>
    %c0_i32_8 = arith.constant 0 : i32
    %18 = vector.broadcast %c0_i32_8 : i32 to vector<8x1xi32>
    %19 = arith.cmpi ne, %17, %18 : vector<8x1xi32>
    %c0_i32_9 = arith.constant 0 : i32
    %20 = vector.broadcast %c0_i32_9 : i32 to vector<8x1xi32>
    %21 = arith.cmpi slt, %17, %20 : vector<8x1xi32>
    %c0_i32_10 = arith.constant 0 : i32
    %22 = arith.cmpi slt, %15, %c0_i32_10 : i32
    %23 = vector.broadcast %22 : i1 to vector<8x1xi1>
    %24 = vector.broadcast %23 : vector<8x1xi1> to vector<8x1xi1>
    %25 = arith.xori %21, %24 : vector<8x1xi1>
    %26 = arith.andi %25, %19 : vector<8x1xi1>
    %27 = vector.broadcast %15 : i32 to vector<8x1xi32>
    %28 = arith.addi %17, %27 : vector<8x1xi32>
    %29 = arith.select %26, %28, %17 : vector<8x1xi1>, vector<8x1xi32>
    %c0_i32_11 = arith.constant 0 : i32
    %30 = vector.broadcast %c0_i32_11 : i32 to vector<8x1xi32>
    %31 = arith.cmpi eq, %29, %30 : vector<8x1xi32>
    %c7_i32 = arith.constant 7 : i32
    %32 = vector.broadcast %c7_i32 : i32 to vector<8x1xi32>
    %33 = arith.cmpi eq, %29, %32 : vector<8x1xi32>
    %c0_12 = arith.constant 0 : index
    %c0_13 = arith.constant 0 : index
    %34 = vector.load %arg5[%c0_12, %c0_13] : memref<1x32xf32, #tpu.memory_space<vmem>>, vector<1x32xf32>
    %c0_14 = arith.constant 0 : index
    %c0_15 = arith.constant 0 : index
    %35 = vector.load %arg6[%c0_14, %c0_15] : memref<1x32xf32, #tpu.memory_space<vmem>>, vector<1x32xf32>
    %cst_16 = arith.constant dense<0.000000e+00> : vector<8xf32>
    %36 = vector.multi_reduction <add>, %12, %cst_16 [1] : vector<8x32xf32> to vector<8xf32>
    %37 = vector.shape_cast %36 : vector<8xf32> to vector<8x1xf32>
    %cst_17 = arith.constant 3.200000e+01 : f32
    %38 = vector.broadcast %cst_17 : f32 to vector<8x1xf32>
    %39 = arith.divf %37, %38 : vector<8x1xf32>
    %40 = vector.broadcast %39 : vector<8x1xf32> to vector<8x32xf32>
    %41 = arith.subf %12, %40 : vector<8x32xf32>
    %42 = arith.mulf %41, %41 : vector<8x32xf32>
    %cst_18 = arith.constant dense<0.000000e+00> : vector<8xf32>
    %43 = vector.multi_reduction <add>, %42, %cst_18 [1] : vector<8x32xf32> to vector<8xf32>
    %44 = vector.shape_cast %43 : vector<8xf32> to vector<8x1xf32>
    %cst_19 = arith.constant 3.200000e+01 : f32
    %45 = vector.broadcast %cst_19 : f32 to vector<8x1xf32>
    %46 = arith.divf %44, %45 : vector<8x1xf32>
    %47 = vector.broadcast %39 : vector<8x1xf32> to vector<8x32xf32>
    %48 = arith.subf %12, %47 : vector<8x32xf32>
    %cst_20 = arith.constant 9.99999997E-7 : f32
    %49 = vector.broadcast %cst_20 : f32 to vector<8x1xf32>
    %50 = arith.addf %46, %49 : vector<8x1xf32>
    %51 = math.rsqrt %50 : vector<8x1xf32>
    %52 = vector.broadcast %51 : vector<8x1xf32> to vector<8x32xf32>
    %53 = arith.mulf %48, %52 : vector<8x32xf32>
    %54 = vector.broadcast %34 : vector<1x32xf32> to vector<8x32xf32>
    %55 = arith.mulf %53, %54 : vector<8x32xf32>
    %56 = vector.broadcast %35 : vector<1x32xf32> to vector<8x32xf32>
    %57 = arith.addf %55, %56 : vector<8x32xf32>
    %c1_i32_21 = arith.constant 1 : i32
    %58 = tpu.dynamic_rotate %57 by %c1_i32_21 dim 0 : vector<8x32xf32>, i32 -> vector<8x32xf32>
    %cst_22 = arith.constant 0.000000e+00 : f32
    %59 = vector.shape_cast %31 : vector<8x1xi1> to vector<8x1xi1>
    %60 = vector.broadcast %59 : vector<8x1xi1> to vector<8x32xi1>
    %61 = vector.broadcast %cst_22 : f32 to vector<8x32xf32>
    %62 = arith.select %60, %61, %58 : vector<8x32xi1>, vector<8x32xf32>
    %63 = arith.truncf %62 : vector<8x32xf32> to vector<8x32xbf16>
    %c7_i32_23 = arith.constant 7 : i32
    %64 = tpu.dynamic_rotate %57 by %c7_i32_23 dim 0 : vector<8x32xf32>, i32 -> vector<8x32xf32>
    %cst_24 = arith.constant 0.000000e+00 : f32
    %65 = vector.shape_cast %33 : vector<8x1xi1> to vector<8x1xi1>
    %66 = vector.broadcast %65 : vector<8x1xi1> to vector<8x32xi1>
    %67 = vector.broadcast %cst_24 : f32 to vector<8x32xf32>
    %68 = arith.select %66, %67, %64 : vector<8x32xi1>, vector<8x32xf32>
    %69 = arith.truncf %68 : vector<8x32xf32> to vector<8x32xbf16>
    %70 = arith.truncf %57 : vector<8x32xf32> to vector<8x32xbf16>
    %71 = tpu.concatenate %63, %70, %69 in 1 : vector<8x32xbf16>, vector<8x32xbf16>, vector<8x32xbf16> -> vector<8x96xbf16>
    %c0_25 = arith.constant 0 : index
    %c0_26 = arith.constant 0 : index
    %72 = vector.load %arg7[%c0_25, %c0_26] : memref<96x64xbf16, #tpu.memory_space<vmem>>, vector<96x64xbf16>
    %cst_27 = arith.constant dense<0.000000e+00> : vector<8x64xf32>
    %73 = tpu.matmul %71, %72, %cst_27 {dimension_numbers = #tpu.dot_dimension_numbers<[1], [0], [0], [1], [0, 0, 1, 1], [], []>} : vector<8x96xbf16>, vector<96x64xbf16>, vector<8x64xf32> -> vector<8x64xf32>
    %c0_28 = arith.constant 0 : index
    %c0_29 = arith.constant 0 : index
    %74 = vector.load %arg8[%c0_28, %c0_29] : memref<1x64xf32, #tpu.memory_space<vmem>>, vector<1x64xf32>
    %75 = vector.broadcast %74 : vector<1x64xf32> to vector<8x64xf32>
    %76 = arith.addf %73, %75 : vector<8x64xf32>
    %cst_30 = arith.constant 0.000000e+00 : f32
    %77 = vector.broadcast %cst_30 : f32 to vector<8x64xf32>
    %78 = arith.maximumf %76, %77 : vector<8x64xf32>
    %79 = arith.truncf %78 : vector<8x64xf32> to vector<8x64xbf16>
    %c0_31 = arith.constant 0 : index
    %c0_32 = arith.constant 0 : index
    %80 = vector.load %arg9[%c0_31, %c0_32] : memref<64x96xbf16, #tpu.memory_space<vmem>>, vector<64x96xbf16>
    %cst_33 = arith.constant dense<0.000000e+00> : vector<8x96xf32>
    %81 = tpu.matmul %79, %80, %cst_33 {dimension_numbers = #tpu.dot_dimension_numbers<[1], [0], [0], [1], [0, 0, 1, 1], [], []>} : vector<8x64xbf16>, vector<64x96xbf16>, vector<8x96xf32> -> vector<8x96xf32>
    %82 = vector.extract_strided_slice %81 {offsets = [0, 0], sizes = [8, 32], strides = [1, 1]} : vector<8x96xf32> to vector<8x32xf32>
    %c1_i32_34 = arith.constant 1 : i32
    %83 = tpu.dynamic_rotate %82 by %c1_i32_34 dim 0 : vector<8x32xf32>, i32 -> vector<8x32xf32>
    %cst_35 = arith.constant 0.000000e+00 : f32
    %84 = vector.shape_cast %31 : vector<8x1xi1> to vector<8x1xi1>
    %85 = vector.broadcast %84 : vector<8x1xi1> to vector<8x32xi1>
    %86 = vector.broadcast %cst_35 : f32 to vector<8x32xf32>
    %87 = arith.select %85, %86, %83 : vector<8x32xi1>, vector<8x32xf32>
    %88 = vector.extract_strided_slice %81 {offsets = [0, 32], sizes = [8, 32], strides = [1, 1]} : vector<8x96xf32> to vector<8x32xf32>
    %89 = arith.addf %87, %88 : vector<8x32xf32>
    %90 = vector.extract_strided_slice %81 {offsets = [0, 64], sizes = [8, 32], strides = [1, 1]} : vector<8x96xf32> to vector<8x32xf32>
    %c7_i32_36 = arith.constant 7 : i32
    %91 = tpu.dynamic_rotate %90 by %c7_i32_36 dim 0 : vector<8x32xf32>, i32 -> vector<8x32xf32>
    %cst_37 = arith.constant 0.000000e+00 : f32
    %92 = vector.shape_cast %33 : vector<8x1xi1> to vector<8x1xi1>
    %93 = vector.broadcast %92 : vector<8x1xi1> to vector<8x32xi1>
    %94 = vector.broadcast %cst_37 : f32 to vector<8x32xf32>
    %95 = arith.select %93, %94, %91 : vector<8x32xi1>, vector<8x32xf32>
    %96 = arith.addf %89, %95 : vector<8x32xf32>
    %c0_38 = arith.constant 0 : index
    %c0_39 = arith.constant 0 : index
    %97 = vector.load %arg10[%c0_38, %c0_39] : memref<1x32xf32, #tpu.memory_space<vmem>>, vector<1x32xf32>
    %98 = vector.broadcast %97 : vector<1x32xf32> to vector<8x32xf32>
    %99 = arith.addf %96, %98 : vector<8x32xf32>
    %100 = arith.addf %99, %12 : vector<8x32xf32>
    %c0_40 = arith.constant 0 : index
    %c0_41 = arith.constant 0 : index
    %101 = vector.load %arg11[%c0_40, %c0_41] : memref<1x32xf32, #tpu.memory_space<vmem>>, vector<1x32xf32>
    %c0_42 = arith.constant 0 : index
    %c0_43 = arith.constant 0 : index
    %102 = vector.load %arg12[%c0_42, %c0_43] : memref<1x32xf32, #tpu.memory_space<vmem>>, vector<1x32xf32>
    %cst_44 = arith.constant dense<0.000000e+00> : vector<8xf32>
    %103 = vector.multi_reduction <add>, %100, %cst_44 [1] : vector<8x32xf32> to vector<8xf32>
    %104 = vector.shape_cast %103 : vector<8xf32> to vector<8x1xf32>
    %cst_45 = arith.constant 3.200000e+01 : f32
    %105 = vector.broadcast %cst_45 : f32 to vector<8x1xf32>
    %106 = arith.divf %104, %105 : vector<8x1xf32>
    %107 = vector.broadcast %106 : vector<8x1xf32> to vector<8x32xf32>
    %108 = arith.subf %100, %107 : vector<8x32xf32>
    %109 = arith.mulf %108, %108 : vector<8x32xf32>
    %cst_46 = arith.constant dense<0.000000e+00> : vector<8xf32>
    %110 = vector.multi_reduction <add>, %109, %cst_46 [1] : vector<8x32xf32> to vector<8xf32>
    %111 = vector.shape_cast %110 : vector<8xf32> to vector<8x1xf32>
    %cst_47 = arith.constant 3.200000e+01 : f32
    %112 = vector.broadcast %cst_47 : f32 to vector<8x1xf32>
    %113 = arith.divf %111, %112 : vector<8x1xf32>
    %114 = vector.broadcast %106 : vector<8x1xf32> to vector<8x32xf32>
    %115 = arith.subf %100, %114 : vector<8x32xf32>
    %cst_48 = arith.constant 9.99999997E-7 : f32
    %116 = vector.broadcast %cst_48 : f32 to vector<8x1xf32>
    %117 = arith.addf %113, %116 : vector<8x1xf32>
    %118 = math.rsqrt %117 : vector<8x1xf32>
    %119 = vector.broadcast %118 : vector<8x1xf32> to vector<8x32xf32>
    %120 = arith.mulf %115, %119 : vector<8x32xf32>
    %121 = vector.broadcast %101 : vector<1x32xf32> to vector<8x32xf32>
    %122 = arith.mulf %120, %121 : vector<8x32xf32>
    %123 = vector.broadcast %102 : vector<1x32xf32> to vector<8x32xf32>
    %124 = arith.addf %122, %123 : vector<8x32xf32>
    %c0_49 = arith.constant 0 : index
    %c0_50 = arith.constant 0 : index
    %125 = vector.load %arg15[%c0_49, %c0_50] : memref<8x32xf32, #tpu.memory_space<vmem>>, vector<8x32xf32>
    tpu.vector_store %arg15[%c0_49, %c0_50], %124 {strides = array<i32>} : memref<8x32xf32, #tpu.memory_space<vmem>>, vector<8x32xf32>,
    %126 = arith.mulf %124, %124 : vector<8x32xf32>
    %cst_51 = arith.constant dense<0.000000e+00> : vector<8xf32>
    %127 = vector.multi_reduction <add>, %126, %cst_51 [1] : vector<8x32xf32> to vector<8xf32>
    %128 = vector.shape_cast %127 : vector<8xf32> to vector<8x1xf32>
    %cst_52 = arith.constant 1.000000e-24 : f32
    %129 = vector.broadcast %cst_52 : f32 to vector<8x1xf32>
    %130 = arith.maximumf %128, %129 : vector<8x1xf32>
    %131 = math.rsqrt %130 : vector<8x1xf32>
    %132 = vector.broadcast %131 : vector<8x1xf32> to vector<8x32xf32>
    %133 = arith.mulf %124, %132 : vector<8x32xf32>
    %c0_53 = arith.constant 0 : index
    %c0_54 = arith.constant 0 : index
    %134 = vector.load %arg16[%c0_53, %c0_54] : memref<8x32xf32, #tpu.memory_space<vmem>>, vector<8x32xf32>
    tpu.vector_store %arg16[%c0_53, %c0_54], %133 {strides = array<i32>} : memref<8x32xf32, #tpu.memory_space<vmem>>, vector<8x32xf32>,
    %135 = vector.shape_cast %124 : vector<8x32xf32> to vector<1x8x32xf32>
    %cst_55 = arith.constant dense<0.000000e+00> : vector<1x32xf32>
    %136 = vector.multi_reduction <add>, %135, %cst_55 [1] : vector<1x8x32xf32> to vector<1x32xf32>
    %cst_56 = arith.constant 1.250000e-01 : f32
    %137 = vector.broadcast %cst_56 : f32 to vector<1x32xf32>
    %138 = arith.mulf %136, %137 : vector<1x32xf32>
    %139 = arith.truncf %138 : vector<1x32xf32> to vector<1x32xbf16>
    %c0_57 = arith.constant 0 : index
    %c0_58 = arith.constant 0 : index
    %140 = vector.load %arg13[%c0_57, %c0_58] : memref<32x128xbf16, #tpu.memory_space<vmem>>, vector<32x128xbf16>
    %cst_59 = arith.constant dense<0.000000e+00> : vector<1x128xf32>
    %141 = tpu.matmul %139, %140, %cst_59 {dimension_numbers = #tpu.dot_dimension_numbers<[1], [0], [0], [1], [0, 0, 1, 1], [], []>} : vector<1x32xbf16>, vector<32x128xbf16>, vector<1x128xf32> -> vector<1x128xf32>
    %c0_60 = arith.constant 0 : index
    %c0_61 = arith.constant 0 : index
    %142 = vector.load %arg14[%c0_60, %c0_61] : memref<1x128xf32, #tpu.memory_space<vmem>>, vector<1x128xf32>
    %143 = arith.addf %141, %142 : vector<1x128xf32>
    %144 = vector.shape_cast %143 : vector<1x128xf32> to vector<1x1x128xf32>
    %c0_62 = arith.constant 0 : index
    %c0_63 = arith.constant 0 : index
    %c0_64 = arith.constant 0 : index
    %145 = vector.load %arg17[%c0_62, %c0_63, %c0_64] : memref<1x1x128xf32, #tpu.memory_space<vmem>>, vector<1x1x128xf32>
    tpu.vector_store %arg17[%c0_62, %c0_63, %c0_64], %144 {strides = array<i32>} : memref<1x1x128xf32, #tpu.memory_space<vmem>>, vector<1x1x128xf32>,
    %cst_65 = arith.constant dense<0xFF800000> : vector<1xf32>
    %146 = vector.multi_reduction <maximumf>, %143, %cst_65 [1] : vector<1x128xf32> to vector<1xf32>
    %147 = vector.shape_cast %146 : vector<1xf32> to vector<1x1xf32>
    %148 = vector.broadcast %147 : vector<1x1xf32> to vector<1x128xf32>
    %149 = arith.subf %143, %148 : vector<1x128xf32>
    %150 = math.exp %149 : vector<1x128xf32>
    %cst_66 = arith.constant dense<0.000000e+00> : vector<1xf32>
    %151 = vector.multi_reduction <add>, %150, %cst_66 [1] : vector<1x128xf32> to vector<1xf32>
    %152 = vector.shape_cast %151 : vector<1xf32> to vector<1x1xf32>
    %153 = vector.broadcast %152 : vector<1x1xf32> to vector<1x128xf32>
    %154 = arith.divf %150, %153 : vector<1x128xf32>
    %155 = vector.shape_cast %154 : vector<1x128xf32> to vector<1x1x128xf32>
    %c0_67 = arith.constant 0 : index
    %c0_68 = arith.constant 0 : index
    %c0_69 = arith.constant 0 : index
    %156 = vector.load %arg18[%c0_67, %c0_68, %c0_69] : memref<1x1x128xf32, #tpu.memory_space<vmem>>, vector<1x1x128xf32>
    tpu.vector_store %arg18[%c0_67, %c0_68, %c0_69], %155 {strides = array<i32>} : memref<1x1x128xf32, #tpu.memory_space<vmem>>, vector<1x1x128xf32>,
    return
  }
  func.func @transform_0(%arg0: i32) -> (i32, i32) {
    %c0_i32 = arith.constant 0 : i32
    %c0_i32_0 = arith.constant 0 : i32
    return %arg0, %c0_i32 : i32, i32
  }
  func.func @transform_1(%arg0: i32) -> (i32, i32) {
    %c0_i32 = arith.constant 0 : i32
    %c0_i32_0 = arith.constant 0 : i32
    %c0_i32_1 = arith.constant 0 : i32
    return %c0_i32, %c0_i32_0 : i32, i32
  }
  func.func @transform_2(%arg0: i32) -> (i32, i32) {
    %c0_i32 = arith.constant 0 : i32
    %c0_i32_0 = arith.constant 0 : i32
    %c0_i32_1 = arith.constant 0 : i32
    return %c0_i32, %c0_i32_0 : i32, i32
  }
  func.func @transform_3(%arg0: i32) -> (i32, i32) {
    %c0_i32 = arith.constant 0 : i32
    %c0_i32_0 = arith.constant 0 : i32
    %c0_i32_1 = arith.constant 0 : i32
    return %c0_i32, %c0_i32_0 : i32, i32
  }
  func.func @transform_4(%arg0: i32) -> (i32, i32) {
    %c0_i32 = arith.constant 0 : i32
    %c0_i32_0 = arith.constant 0 : i32
    %c0_i32_1 = arith.constant 0 : i32
    return %c0_i32, %c0_i32_0 : i32, i32
  }
  func.func @transform_5(%arg0: i32) -> (i32, i32) {
    %c0_i32 = arith.constant 0 : i32
    %c0_i32_0 = arith.constant 0 : i32
    %c0_i32_1 = arith.constant 0 : i32
    return %c0_i32, %c0_i32_0 : i32, i32
  }
  func.func @transform_6(%arg0: i32) -> (i32, i32) {
    %c0_i32 = arith.constant 0 : i32
    %c0_i32_0 = arith.constant 0 : i32
    %c0_i32_1 = arith.constant 0 : i32
    return %c0_i32, %c0_i32_0 : i32, i32
  }
  func.func @transform_7(%arg0: i32) -> (i32, i32) {
    %c0_i32 = arith.constant 0 : i32
    %c0_i32_0 = arith.constant 0 : i32
    %c0_i32_1 = arith.constant 0 : i32
    return %c0_i32, %c0_i32_0 : i32, i32
  }
  func.func @transform_8(%arg0: i32) -> (i32, i32) {
    %c0_i32 = arith.constant 0 : i32
    %c0_i32_0 = arith.constant 0 : i32
    %c0_i32_1 = arith.constant 0 : i32
    return %c0_i32, %c0_i32_0 : i32, i32
  }
  func.func @transform_9(%arg0: i32) -> (i32, i32) {
    %c0_i32 = arith.constant 0 : i32
    %c0_i32_0 = arith.constant 0 : i32
    %c0_i32_1 = arith.constant 0 : i32
    return %c0_i32, %c0_i32_0 : i32, i32
  }
  func.func @transform_10(%arg0: i32) -> (i32, i32) {
    %c0_i32 = arith.constant 0 : i32
    %c0_i32_0 = arith.constant 0 : i32
    %c0_i32_1 = arith.constant 0 : i32
    return %c0_i32, %c0_i32_0 : i32, i32
  }
  func.func @transform_11(%arg0: i32) -> (i32, i32) {
    %c0_i32 = arith.constant 0 : i32
    %c0_i32_0 = arith.constant 0 : i32
    %c0_i32_1 = arith.constant 0 : i32
    return %c0_i32, %c0_i32_0 : i32, i32
  }
  func.func @transform_12(%arg0: i32) -> (i32, i32) {
    %c0_i32 = arith.constant 0 : i32
    %c0_i32_0 = arith.constant 0 : i32
    %c0_i32_1 = arith.constant 0 : i32
    return %c0_i32, %c0_i32_0 : i32, i32
  }
  func.func @transform_13(%arg0: i32) -> (i32, i32) {
    %c0_i32 = arith.constant 0 : i32
    %c0_i32_0 = arith.constant 0 : i32
    %c0_i32_1 = arith.constant 0 : i32
    return %c0_i32, %c0_i32_0 : i32, i32
  }
  func.func @transform_14(%arg0: i32) -> (i32, i32) {
    %c0_i32 = arith.constant 0 : i32
    %c0_i32_0 = arith.constant 0 : i32
    return %arg0, %c0_i32 : i32, i32
  }
  func.func @transform_15(%arg0: i32) -> (i32, i32) {
    %c0_i32 = arith.constant 0 : i32
    %c0_i32_0 = arith.constant 0 : i32
    return %arg0, %c0_i32 : i32, i32
  }
  func.func @transform_16(%arg0: i32) -> (i32, i32, i32) {
    %c0_i32 = arith.constant 0 : i32
    %c0_i32_0 = arith.constant 0 : i32
    %c0_i32_1 = arith.constant 0 : i32
    return %arg0, %c0_i32, %c0_i32_0 : i32, i32, i32
  }
  func.func @transform_17(%arg0: i32) -> (i32, i32, i32) {
    %c0_i32 = arith.constant 0 : i32
    %c0_i32_0 = arith.constant 0 : i32
    %c0_i32_1 = arith.constant 0 : i32
    return %arg0, %c0_i32, %c0_i32_0 : i32, i32, i32
  }
}

</mosaic_0001>

<llo_original>
// kernel: tpu_custom_call.1
$region0: #{tpu_custom_call.1}
  #allocation0 [shape = 'u32[]', space=smem, size = 0x4, offset = 0x4, fixed_abs, tag = 'smem constant byte address 0x4 - core index']
  #allocation1 [shape = 'u32[144,128]{1,0:T(1,128)}', space=vmem, size = 0x12000, scoped, tag = 'internal scratch']
  %s0 = inlined_call_operand.vmem [shape: bf16[16,128], index: 0, kind: input, shape index: {}]
  %s1 = inlined_call_operand.vmem [shape: bf16[128,32], index: 1, kind: input, shape index: {}]
  %s2 = inlined_call_operand.vmem [shape: f32[1,32], index: 2, kind: input, shape index: {}]
  %s3 = inlined_call_operand.vmem [shape: f32[8,32], index: 3, kind: input, shape index: {}]
  %s4 = inlined_call_operand.vmem [shape: f32[1,32], index: 4, kind: input, shape index: {}]
  %s5 = inlined_call_operand.vmem [shape: f32[1,32], index: 5, kind: input, shape index: {}]
  %s6 = inlined_call_operand.vmem [shape: bf16[96,64], index: 6, kind: input, shape index: {}]
  %s7 = inlined_call_operand.vmem [shape: f32[1,64], index: 7, kind: input, shape index: {}]
  %s8 = inlined_call_operand.vmem [shape: bf16[64,96], index: 8, kind: input, shape index: {}]
  %s9 = inlined_call_operand.vmem [shape: f32[1,32], index: 9, kind: input, shape index: {}]
  %s10 = inlined_call_operand.vmem [shape: f32[1,32], index: 10, kind: input, shape index: {}]
  %s11 = inlined_call_operand.vmem [shape: f32[1,32], index: 11, kind: input, shape index: {}]
  %s12 = inlined_call_operand.vmem [shape: bf16[32,128], index: 12, kind: input, shape index: {}]
  %s13 = inlined_call_operand.vmem [shape: f32[1,128], index: 13, kind: input, shape index: {}]
  %s14 = inlined_call_operand.hbm [shape: f32[16,32], index: 14, kind: output, shape index: {0}]
  %s15 = inlined_call_operand.hbm [shape: f32[16,32], index: 15, kind: output, shape index: {1}]
  %s16 = inlined_call_operand.hbm [shape: f32[2,1,128], index: 16, kind: output, shape index: {2}]
  %s17 = inlined_call_operand.hbm [shape: f32[2,1,128], index: 17, kind: output, shape index: {3}]
  %18 = xla_tuple %s14, %s15, %s16, %s17
  %s19 = sld [smem:[#allocation0]]
  $region113: #{tpu_custom_call.1} parent=0
    _
  %s21 = ssub.s32 1, %s19
  %s22 = scalar_select 0, %s21, %s19
  $region1: #{tpu_custom_call.1} parent=0
    #allocation2 [shape = 'u8[8192]{0}', space=vmem, size = 0x2000, scoped, tag = 'output window, operand 0']
    #allocation3 [shape = 's32[2]{0}', space=sflag, size = 0x8, scoped, tag = 'scoped memory for tpu_custom_call.1']
    #allocation4 [shape = 'u8[8192]{0}', space=vmem, size = 0x2000, scoped, tag = 'output window, operand 1']
    #allocation5 [shape = 's32[2]{0}', space=sflag, size = 0x8, scoped, tag = 'scoped memory for tpu_custom_call.1']
    #allocation6 [shape = 'u8[1024]{0}', space=vmem, size = 0x400, scoped, tag = 'output window, operand 2']
    #allocation7 [shape = 'u8[1024]{0}', space=vmem, size = 0x400, scoped, tag = 'output window, operand 3']
    #allocation8 [shape = 's32[2]{0}', space=sflag, size = 0x8, scoped, tag = 'scoped memory for tpu_custom_call.1']
    %23 = vsyncpa [#allocation3], 0
    %s24 = scalar_lea.sflag [#allocation3], 1
    %25 = vsyncpa %s24, 0
    %26 = vsyncpa [#allocation5], 0
    %s27 = scalar_lea.sflag [#allocation5], 1
    %28 = vsyncpa %s27, 0
    %29 = vsyncpa [#allocation8], 0
    %s30 = scalar_lea.sflag [#allocation8], 1
    %31 = vsyncpa %s30, 0
    loop: start=0, step=1, limit=4
    $region2: #{tpu_custom_call.1} parent=1 // loop_pre_header
      _
    $region3: #{tpu_custom_call.1} parent=1 // loop_header
      %s33 = sphi 0, %s37
      %p34 = scmp.ge.s32.totalorder %s33, 4
      %s43 = sphi 0, %s45
      %s46 = sphi 0, %s43
      %s47 = sphi 0, %s46
      %s63 = sphi 0, %s47
      %s67 = sphi 0, %s67
      %s69 = sphi 0, %s67
      %s70 = sphi 0, %s69
      %s84 = sphi 0, %s70
      %s88 = sphi 0, %s88
      %s90 = sphi 0, %s88
      %s91 = sphi 0, %s90
      %s105 = sphi 0, %s91
      %s109 = sphi 0, %s109
      %s111 = sphi 0, %s109
      %s112 = sphi 0, %s111
      %s126 = sphi 0, %s112
      %s130 = sphi 0, %s130
      %s132 = sphi 0, %s130
      %s133 = sphi 0, %s132
      %s147 = sphi 0, %s133
      %s151 = sphi 0, %s151
      %s153 = sphi 0, %s151
      %s154 = sphi 0, %s153
      %s168 = sphi 0, %s154
      %s172 = sphi 0, %s172
      %s174 = sphi 0, %s172
      %s175 = sphi 0, %s174
      %s189 = sphi 0, %s175
      %s193 = sphi 0, %s193
      %s195 = sphi 0, %s193
      %s196 = sphi 0, %s195
      %s210 = sphi 0, %s196
      %s214 = sphi 0, %s214
      %s216 = sphi 0, %s214
      %s217 = sphi 0, %s216
      %s231 = sphi 0, %s217
      %s235 = sphi 0, %s235
      %s237 = sphi 0, %s235
      %s238 = sphi 0, %s237
      %s252 = sphi 0, %s238
      %s256 = sphi 0, %s256
      %s258 = sphi 0, %s256
      %s259 = sphi 0, %s258
      %s273 = sphi 0, %s259
      %s277 = sphi 0, %s277
      %s279 = sphi 0, %s277
      %s280 = sphi 0, %s279
      %s294 = sphi 0, %s280
      %s298 = sphi 0, %s298
      %s300 = sphi 0, %s298
      %s301 = sphi 0, %s300
      %s315 = sphi 0, %s301
      %s319 = sphi 0, %s319
      %s321 = sphi 0, %s319
      %s322 = sphi 0, %s321
      %s336 = sphi 0, %s322
      %s342 = sphi 0, %s344
      %s345 = sphi 0, %s342
      %s346 = sphi 0, %s345
      %s362 = sphi 0, %s346
      %s368 = sphi 0, %s370
      %s371 = sphi 0, %s368
      %s372 = sphi 0, %s371
      %s388 = sphi 0, %s372
      %s394 = sphi 0, %s396
      %s397 = sphi 0, %s394
      %s398 = sphi 0, %s397
      %s414 = sphi 0, %s398
      %s420 = sphi 0, %s422
      %s423 = sphi 0, %s420
      %s424 = sphi 0, %s423
      %s440 = sphi 0, %s424
    $region4: #{tpu_custom_call.1} parent=1 // loop_header_branch
      %36 = sbr.rel (%p34) target = $region8
    $region5: #{tpu_custom_call.1} parent=1 // loop_body
      %s38 = ssub.s32 %s33, 1
      %s39 = ssub.s32 %s33, 2
      %s40 = sadd.s32 %s33, 1
      %s41 = ssub.s32 %s33, %s40
      %p42 = scmp.eq.s32.totalorder %s41, 0
      %s44 = sadd.s32 %s43, 1
      %s45 = scalar_select %p42, %s43, %s44
      %p48 = pneg %p42
      %p49 = scmp.eq.s32.totalorder %s33, 1
      %p50 = por %p48, %p49
      %p51 = scmp.ne.s32.totalorder %s43, %s46
      %p52 = scmp.eq.s32.totalorder %s33, 0
      %p53 = por %p51, %p52
      %p54 = scmp.ne.s32.totalorder %s43, %s46
      %p55 = scmp.eq.s32.totalorder %s38, 1
      %p56 = por %p54, %p55
      %p57 = scmp.ne.s32.totalorder %s46, %s47
      %p58 = scmp.eq.s32.totalorder %s38, 0
      %p59 = por %p57, %p58
      %p60 = scmp.ne.s32.totalorder %s46, %s47
      %p61 = scmp.eq.s32.totalorder %s39, 1
      %p62 = por %p60, %p61
      %p64 = scmp.ne.s32.totalorder %s47, %s63
      %p65 = scmp.eq.s32.totalorder %s39, 0
      %p66 = por %p64, %p65
      %s68 = sadd.s32 %s67, 1
      %p71 = scmp.eq.s32.totalorder %s33, 1
      %p72 = scmp.ne.s32.totalorder %s67, %s69
      %p73 = scmp.eq.s32.totalorder %s33, 0
      %p74 = por %p72, %p73
      %p75 = scmp.ne.s32.totalorder %s67, %s69
      %p76 = scmp.eq.s32.totalorder %s38, 1
      %p77 = por %p75, %p76
      %p78 = scmp.ne.s32.totalorder %s69, %s70
      %p79 = scmp.eq.s32.totalorder %s38, 0
      %p80 = por %p78, %p79
      %p81 = scmp.ne.s32.totalorder %s69, %s70
      %p82 = scmp.eq.s32.totalorder %s39, 1
      %p83 = por %p81, %p82
      %p85 = scmp.ne.s32.totalorder %s70, %s84
      %p86 = scmp.eq.s32.totalorder %s39, 0
      %p87 = por %p85, %p86
      %s89 = sadd.s32 %s88, 1
      %p92 = scmp.eq.s32.totalorder %s33, 1
      %p93 = scmp.ne.s32.totalorder %s88, %s90
      %p94 = scmp.eq.s32.totalorder %s33, 0
      %p95 = por %p93, %p94
      %p96 = scmp.ne.s32.totalorder %s88, %s90
      %p97 = scmp.eq.s32.totalorder %s38, 1
      %p98 = por %p96, %p97
      %p99 = scmp.ne.s32.totalorder %s90, %s91
      %p100 = scmp.eq.s32.totalorder %s38, 0
      %p101 = por %p99, %p100
      %p102 = scmp.ne.s32.totalorder %s90, %s91
      %p103 = scmp.eq.s32.totalorder %s39, 1
      %p104 = por %p102, %p103
      %p106 = scmp.ne.s32.totalorder %s91, %s105
      %p107 = scmp.eq.s32.totalorder %s39, 0
      %p108 = por %p106, %p107
      %s110 = sadd.s32 %s109, 1
      %p113 = scmp.eq.s32.totalorder %s33, 1
      %p114 = scmp.ne.s32.totalorder %s109, %s111
      %p115 = scmp.eq.s32.totalorder %s33, 0
      %p116 = por %p114, %p115
      %p117 = scmp.ne.s32.totalorder %s109, %s111
      %p118 = scmp.eq.s32.totalorder %s38, 1
      %p119 = por %p117, %p118
      %p120 = scmp.ne.s32.totalorder %s111, %s112
      %p121 = scmp.eq.s32.totalorder %s38, 0
      %p122 = por %p120, %p121
      %p123 = scmp.ne.s32.totalorder %s111, %s112
      %p124 = scmp.eq.s32.totalorder %s39, 1
      %p125 = por %p123, %p124
      %p127 = scmp.ne.s32.totalorder %s112, %s126
      %p128 = scmp.eq.s32.totalorder %s39, 0
      %p129 = por %p127, %p128
      %s131 = sadd.s32 %s130, 1
      %p134 = scmp.eq.s32.totalorder %s33, 1
      %p135 = scmp.ne.s32.totalorder %s130, %s132
      %p136 = scmp.eq.s32.totalorder %s33, 0
      %p137 = por %p135, %p136
      %p138 = scmp.ne.s32.totalorder %s130, %s132
      %p139 = scmp.eq.s32.totalorder %s38, 1
      %p140 = por %p138, %p139
      %p141 = scmp.ne.s32.totalorder %s132, %s133
      %p142 = scmp.eq.s32.totalorder %s38, 0
      %p143 = por %p141, %p142
      %p144 = scmp.ne.s32.totalorder %s132, %s133
      %p145 = scmp.eq.s32.totalorder %s39, 1
      %p146 = por %p144, %p145
      %p148 = scmp.ne.s32.totalorder %s133, %s147
      %p149 = scmp.eq.s32.totalorder %s39, 0
      %p150 = por %p148, %p149
      %s152 = sadd.s32 %s151, 1
      %p155 = scmp.eq.s32.totalorder %s33, 1
      %p156 = scmp.ne.s32.totalorder %s151, %s153
      %p157 = scmp.eq.s32.totalorder %s33, 0
      %p158 = por %p156, %p157
      %p159 = scmp.ne.s32.totalorder %s151, %s153
      %p160 = scmp.eq.s32.totalorder %s38, 1
      %p161 = por %p159, %p160
      %p162 = scmp.ne.s32.totalorder %s153, %s154
      %p163 = scmp.eq.s32.totalorder %s38, 0
      %p164 = por %p162, %p163
      %p165 = scmp.ne.s32.totalorder %s153, %s154
      %p166 = scmp.eq.s32.totalorder %s39, 1
      %p167 = por %p165, %p166
      %p169 = scmp.ne.s32.totalorder %s154, %s168
      %p170 = scmp.eq.s32.totalorder %s39, 0
      %p171 = por %p169, %p170
      %s173 = sadd.s32 %s172, 1
      %p176 = scmp.eq.s32.totalorder %s33, 1
      %p177 = scmp.ne.s32.totalorder %s172, %s174
      %p178 = scmp.eq.s32.totalorder %s33, 0
      %p179 = por %p177, %p178
      %p180 = scmp.ne.s32.totalorder %s172, %s174
      %p181 = scmp.eq.s32.totalorder %s38, 1
      %p182 = por %p180, %p181
      %p183 = scmp.ne.s32.totalorder %s174, %s175
      %p184 = scmp.eq.s32.totalorder %s38, 0
      %p185 = por %p183, %p184
      %p186 = scmp.ne.s32.totalorder %s174, %s175
      %p187 = scmp.eq.s32.totalorder %s39, 1
      %p188 = por %p186, %p187
      %p190 = scmp.ne.s32.totalorder %s175, %s189
      %p191 = scmp.eq.s32.totalorder %s39, 0
      %p192 = por %p190, %p191
      %s194 = sadd.s32 %s193, 1
      %p197 = scmp.eq.s32.totalorder %s33, 1
      %p198 = scmp.ne.s32.totalorder %s193, %s195
      %p199 = scmp.eq.s32.totalorder %s33, 0
      %p200 = por %p198, %p199
      %p201 = scmp.ne.s32.totalorder %s193, %s195
      %p202 = scmp.eq.s32.totalorder %s38, 1
      %p203 = por %p201, %p202
      %p204 = scmp.ne.s32.totalorder %s195, %s196
      %p205 = scmp.eq.s32.totalorder %s38, 0
      %p206 = por %p204, %p205
      %p207 = scmp.ne.s32.totalorder %s195, %s196
      %p208 = scmp.eq.s32.totalorder %s39, 1
      %p209 = por %p207, %p208
      %p211 = scmp.ne.s32.totalorder %s196, %s210
      %p212 = scmp.eq.s32.totalorder %s39, 0
      %p213 = por %p211, %p212
      %s215 = sadd.s32 %s214, 1
      %p218 = scmp.eq.s32.totalorder %s33, 1
      %p219 = scmp.ne.s32.totalorder %s214, %s216
      %p220 = scmp.eq.s32.totalorder %s33, 0
      %p221 = por %p219, %p220
      %p222 = scmp.ne.s32.totalorder %s214, %s216
      %p223 = scmp.eq.s32.totalorder %s38, 1
      %p224 = por %p222, %p223
      %p225 = scmp.ne.s32.totalorder %s216, %s217
      %p226 = scmp.eq.s32.totalorder %s38, 0
      %p227 = por %p225, %p226
      %p228 = scmp.ne.s32.totalorder %s216, %s217
      %p229 = scmp.eq.s32.totalorder %s39, 1
      %p230 = por %p228, %p229
      %p232 = scmp.ne.s32.totalorder %s217, %s231
      %p233 = scmp.eq.s32.totalorder %s39, 0
      %p234 = por %p232, %p233
      %s236 = sadd.s32 %s235, 1
      %p239 = scmp.eq.s32.totalorder %s33, 1
      %p240 = scmp.ne.s32.totalorder %s235, %s237
      %p241 = scmp.eq.s32.totalorder %s33, 0
      %p242 = por %p240, %p241
      %p243 = scmp.ne.s32.totalorder %s235, %s237
      %p244 = scmp.eq.s32.totalorder %s38, 1
      %p245 = por %p243, %p244
      %p246 = scmp.ne.s32.totalorder %s237, %s238
      %p247 = scmp.eq.s32.totalorder %s38, 0
      %p248 = por %p246, %p247
      %p249 = scmp.ne.s32.totalorder %s237, %s238
      %p250 = scmp.eq.s32.totalorder %s39, 1
      %p251 = por %p249, %p250
      %p253 = scmp.ne.s32.totalorder %s238, %s252
      %p254 = scmp.eq.s32.totalorder %s39, 0
      %p255 = por %p253, %p254
      %s257 = sadd.s32 %s256, 1
      %p260 = scmp.eq.s32.totalorder %s33, 1
      %p261 = scmp.ne.s32.totalorder %s256, %s258
      %p262 = scmp.eq.s32.totalorder %s33, 0
      %p263 = por %p261, %p262
      %p264 = scmp.ne.s32.totalorder %s256, %s258
      %p265 = scmp.eq.s32.totalorder %s38, 1
      %p266 = por %p264, %p265
      %p267 = scmp.ne.s32.totalorder %s258, %s259
      %p268 = scmp.eq.s32.totalorder %s38, 0
      %p269 = por %p267, %p268
      %p270 = scmp.ne.s32.totalorder %s258, %s259
      %p271 = scmp.eq.s32.totalorder %s39, 1
      %p272 = por %p270, %p271
      %p274 = scmp.ne.s32.totalorder %s259, %s273
      %p275 = scmp.eq.s32.totalorder %s39, 0
      %p276 = por %p274, %p275
      %s278 = sadd.s32 %s277, 1
      %p281 = scmp.eq.s32.totalorder %s33, 1
      %p282 = scmp.ne.s32.totalorder %s277, %s279
      %p283 = scmp.eq.s32.totalorder %s33, 0
      %p284 = por %p282, %p283
      %p285 = scmp.ne.s32.totalorder %s277, %s279
      %p286 = scmp.eq.s32.totalorder %s38, 1
      %p287 = por %p285, %p286
      %p288 = scmp.ne.s32.totalorder %s279, %s280
      %p289 = scmp.eq.s32.totalorder %s38, 0
      %p290 = por %p288, %p289
      %p291 = scmp.ne.s32.totalorder %s279, %s280
      %p292 = scmp.eq.s32.totalorder %s39, 1
      %p293 = por %p291, %p292
      %p295 = scmp.ne.s32.totalorder %s280, %s294
      %p296 = scmp.eq.s32.totalorder %s39, 0
      %p297 = por %p295, %p296
      %s299 = sadd.s32 %s298, 1
      %p302 = scmp.eq.s32.totalorder %s33, 1
      %p303 = scmp.ne.s32.totalorder %s298, %s300
      %p304 = scmp.eq.s32.totalorder %s33, 0
      %p305 = por %p303, %p304
      %p306 = scmp.ne.s32.totalorder %s298, %s300
      %p307 = scmp.eq.s32.totalorder %s38, 1
      %p308 = por %p306, %p307
      %p309 = scmp.ne.s32.totalorder %s300, %s301
      %p310 = scmp.eq.s32.totalorder %s38, 0
      %p311 = por %p309, %p310
      %p312 = scmp.ne.s32.totalorder %s300, %s301
      %p313 = scmp.eq.s32.totalorder %s39, 1
      %p314 = por %p312, %p313
      %p316 = scmp.ne.s32.totalorder %s301, %s315
      %p317 = scmp.eq.s32.totalorder %s39, 0
      %p318 = por %p316, %p317
      %s320 = sadd.s32 %s319, 1
      %p323 = scmp.eq.s32.totalorder %s33, 1
      %p324 = scmp.ne.s32.totalorder %s319, %s321
      %p325 = scmp.eq.s32.totalorder %s33, 0
      %p326 = por %p324, %p325
      %p327 = scmp.ne.s32.totalorder %s319, %s321
      %p328 = scmp.eq.s32.totalorder %s38, 1
      %p329 = por %p327, %p328
      %p330 = scmp.ne.s32.totalorder %s321, %s322
      %p331 = scmp.eq.s32.totalorder %s38, 0
      %p332 = por %p330, %p331
      %p333 = scmp.ne.s32.totalorder %s321, %s322
      %p334 = scmp.eq.s32.totalorder %s39, 1
      %p335 = por %p333, %p334
      %p337 = scmp.ne.s32.totalorder %s322, %s336
      %p338 = scmp.eq.s32.totalorder %s39, 0
      %p339 = por %p337, %p338
      %s340 = ssub.s32 %s33, %s40
      %p341 = scmp.eq.s32.totalorder %s340, 0
      %s343 = sadd.s32 %s342, 1
      %s344 = scalar_select %p341, %s342, %s343
      %p347 = pneg %p341
      %p348 = scmp.eq.s32.totalorder %s33, 1
      %p349 = por %p347, %p348
      %p350 = scmp.ne.s32.totalorder %s342, %s345
      %p351 = scmp.eq.s32.totalorder %s33, 0
      %p352 = por %p350, %p351
      %p353 = scmp.ne.s32.totalorder %s342, %s345
      %p354 = scmp.eq.s32.totalorder %s38, 1
      %p355 = por %p353, %p354
      %p356 = scmp.ne.s32.totalorder %s345, %s346
      %p357 = scmp.eq.s32.totalorder %s38, 0
      %p358 = por %p356, %p357
      %p359 = scmp.ne.s32.totalorder %s345, %s346
      %p360 = scmp.eq.s32.totalorder %s39, 1
      %p361 = por %p359, %p360
      %p363 = scmp.ne.s32.totalorder %s346, %s362
      %p364 = scmp.eq.s32.totalorder %s39, 0
      %p365 = por %p363, %p364
      %s366 = ssub.s32 %s33, %s40
      %p367 = scmp.eq.s32.totalorder %s366, 0
      %s369 = sadd.s32 %s368, 1
      %s370 = scalar_select %p367, %s368, %s369
      %p373 = pneg %p367
      %p374 = scmp.eq.s32.totalorder %s33, 1
      %p375 = por %p373, %p374
      %p376 = scmp.ne.s32.totalorder %s368, %s371
      %p377 = scmp.eq.s32.totalorder %s33, 0
      %p378 = por %p376, %p377
      %p379 = scmp.ne.s32.totalorder %s368, %s371
      %p380 = scmp.eq.s32.totalorder %s38, 1
      %p381 = por %p379, %p380
      %p382 = scmp.ne.s32.totalorder %s371, %s372
      %p383 = scmp.eq.s32.totalorder %s38, 0
      %p384 = por %p382, %p383
      %p385 = scmp.ne.s32.totalorder %s371, %s372
      %p386 = scmp.eq.s32.totalorder %s39, 1
      %p387 = por %p385, %p386
      %p389 = scmp.ne.s32.totalorder %s372, %s388
      %p390 = scmp.eq.s32.totalorder %s39, 0
      %p391 = por %p389, %p390
      %s392 = ssub.s32 %s33, %s40
      %p393 = scmp.eq.s32.totalorder %s392, 0
      %s395 = sadd.s32 %s394, 1
      %s396 = scalar_select %p393, %s394, %s395
      %p399 = pneg %p393
      %p400 = scmp.eq.s32.totalorder %s33, 1
      %p401 = por %p399, %p400
      %p402 = scmp.ne.s32.totalorder %s394, %s397
      %p403 = scmp.eq.s32.totalorder %s33, 0
      %p404 = por %p402, %p403
      %p405 = scmp.ne.s32.totalorder %s394, %s397
      %p406 = scmp.eq.s32.totalorder %s38, 1
      %p407 = por %p405, %p406
      %p408 = scmp.ne.s32.totalorder %s397, %s398
      %p409 = scmp.eq.s32.totalorder %s38, 0
      %p410 = por %p408, %p409
      %p411 = scmp.ne.s32.totalorder %s397, %s398
      %p412 = scmp.eq.s32.totalorder %s39, 1
      %p413 = por %p411, %p412
      %p415 = scmp.ne.s32.totalorder %s398, %s414
      %p416 = scmp.eq.s32.totalorder %s39, 0
      %p417 = por %p415, %p416
      %s418 = ssub.s32 %s33, %s40
      %p419 = scmp.eq.s32.totalorder %s418, 0
      %s421 = sadd.s32 %s420, 1
      %s422 = scalar_select %p419, %s420, %s421
      %p425 = pneg %p419
      %p426 = scmp.eq.s32.totalorder %s33, 1
      %p427 = por %p425, %p426
      %p428 = scmp.ne.s32.totalorder %s420, %s423
      %p429 = scmp.eq.s32.totalorder %s33, 0
      %p430 = por %p428, %p429
      %p431 = scmp.ne.s32.totalorder %s420, %s423
      %p432 = scmp.eq.s32.totalorder %s38, 1
      %p433 = por %p431, %p432
      %p434 = scmp.ne.s32.totalorder %s423, %s424
      %p435 = scmp.eq.s32.totalorder %s38, 0
      %p436 = por %p434, %p435
      %p437 = scmp.ne.s32.totalorder %s423, %s424
      %p438 = scmp.eq.s32.totalorder %s39, 1
      %p439 = por %p437, %p438
      %p441 = scmp.ne.s32.totalorder %s424, %s440
      %p442 = scmp.eq.s32.totalorder %s39, 0
      %p443 = por %p441, %p442
      %p444 = scmp.le.s32.totalorder 1, %s33
      %p445 = scmp.lt.s32.totalorder %s33, 3
      %p446 = pnand %p444, %p445
      %p447 = pneg %p446
      // Predicated region
      $region9: #{tpu_custom_call.1} parent=5 // pred_check
        _
      $region10: #{tpu_custom_call.1} parent=5 // pred_check_branch
        %449 = sbr.rel (%p446) target = $region12
      $region11: #{tpu_custom_call.1} parent=5 // pred_region
        %s450 = ssub.s32 %s33, 1
        // Predicated region
        $region13: #{tpu_custom_call.1} parent=11 // pred_check
          %p451 = pneg %p80
        $region14: #{tpu_custom_call.1} parent=11 // pred_check_branch
          %453 = sbr.rel (%p451) target = $region16
        $region15: #{tpu_custom_call.1} parent=11 // pred_region
          _
        $region16: #{tpu_custom_call.1} parent=11 // pred_fallthru
          _
        // Predicated region
        $region17: #{tpu_custom_call.1} parent=11 // pred_check
          %p454 = pneg %p101
        $region18: #{tpu_custom_call.1} parent=11 // pred_check_branch
          %456 = sbr.rel (%p454) target = $region20
        $region19: #{tpu_custom_call.1} parent=11 // pred_region
          _
        $region20: #{tpu_custom_call.1} parent=11 // pred_fallthru
          _
        // Predicated region
        $region21: #{tpu_custom_call.1} parent=11 // pred_check
          %p457 = pneg %p122
        $region22: #{tpu_custom_call.1} parent=11 // pred_check_branch
          %459 = sbr.rel (%p457) target = $region24
        $region23: #{tpu_custom_call.1} parent=11 // pred_region
          _
        $region24: #{tpu_custom_call.1} parent=11 // pred_fallthru
          _
        // Predicated region
        $region25: #{tpu_custom_call.1} parent=11 // pred_check
          %p460 = pneg %p143
        $region26: #{tpu_custom_call.1} parent=11 // pred_check_branch
          %462 = sbr.rel (%p460) target = $region28
        $region27: #{tpu_custom_call.1} parent=11 // pred_region
          _
        $region28: #{tpu_custom_call.1} parent=11 // pred_fallthru
          _
        // Predicated region
        $region29: #{tpu_custom_call.1} parent=11 // pred_check
          %p463 = pneg %p164
        $region30: #{tpu_custom_call.1} parent=11 // pred_check_branch
          %465 = sbr.rel (%p463) target = $region32
        $region31: #{tpu_custom_call.1} parent=11 // pred_region
          _
        $region32: #{tpu_custom_call.1} parent=11 // pred_fallthru
          _
        // Predicated region
        $region33: #{tpu_custom_call.1} parent=11 // pred_check
          %p466 = pneg %p185
        $region34: #{tpu_custom_call.1} parent=11 // pred_check_branch
          %468 = sbr.rel (%p466) target = $region36
        $region35: #{tpu_custom_call.1} parent=11 // pred_region
          _
        $region36: #{tpu_custom_call.1} parent=11 // pred_fallthru
          _
        // Predicated region
        $region37: #{tpu_custom_call.1} parent=11 // pred_check
          %p469 = pneg %p206
        $region38: #{tpu_custom_call.1} parent=11 // pred_check_branch
          %471 = sbr.rel (%p469) target = $region40
        $region39: #{tpu_custom_call.1} parent=11 // pred_region
          _
        $region40: #{tpu_custom_call.1} parent=11 // pred_fallthru
          _
        // Predicated region
        $region41: #{tpu_custom_call.1} parent=11 // pred_check
          %p472 = pneg %p227
        $region42: #{tpu_custom_call.1} parent=11 // pred_check_branch
          %474 = sbr.rel (%p472) target = $region44
        $region43: #{tpu_custom_call.1} parent=11 // pred_region
          _
        $region44: #{tpu_custom_call.1} parent=11 // pred_fallthru
          _
        // Predicated region
        $region45: #{tpu_custom_call.1} parent=11 // pred_check
          %p475 = pneg %p248
        $region46: #{tpu_custom_call.1} parent=11 // pred_check_branch
          %477 = sbr.rel (%p475) target = $region48
        $region47: #{tpu_custom_call.1} parent=11 // pred_region
          _
        $region48: #{tpu_custom_call.1} parent=11 // pred_fallthru
          _
        // Predicated region
        $region49: #{tpu_custom_call.1} parent=11 // pred_check
          %p478 = pneg %p269
        $region50: #{tpu_custom_call.1} parent=11 // pred_check_branch
          %480 = sbr.rel (%p478) target = $region52
        $region51: #{tpu_custom_call.1} parent=11 // pred_region
          _
        $region52: #{tpu_custom_call.1} parent=11 // pred_fallthru
          _
        // Predicated region
        $region53: #{tpu_custom_call.1} parent=11 // pred_check
          %p481 = pneg %p290
        $region54: #{tpu_custom_call.1} parent=11 // pred_check_branch
          %483 = sbr.rel (%p481) target = $region56
        $region55: #{tpu_custom_call.1} parent=11 // pred_region
          _
        $region56: #{tpu_custom_call.1} parent=11 // pred_fallthru
          _
        // Predicated region
        $region57: #{tpu_custom_call.1} parent=11 // pred_check
          %p484 = pneg %p311
        $region58: #{tpu_custom_call.1} parent=11 // pred_check_branch
          %486 = sbr.rel (%p484) target = $region60
        $region59: #{tpu_custom_call.1} parent=11 // pred_region
          _
        $region60: #{tpu_custom_call.1} parent=11 // pred_fallthru
          _
        // Predicated region
        $region61: #{tpu_custom_call.1} parent=11 // pred_check
          %p487 = pneg %p332
        $region62: #{tpu_custom_call.1} parent=11 // pred_check_branch
          %489 = sbr.rel (%p487) target = $region64
        $region63: #{tpu_custom_call.1} parent=11 // pred_region
          _
        $region64: #{tpu_custom_call.1} parent=11 // pred_fallthru
          _
      $region12: #{tpu_custom_call.1} parent=5 // pred_fallthru
        _
      %p490 = scmp.lt.s32.totalorder %s33, 2
      // Predicated region
      $region65: #{tpu_custom_call.1} parent=5 // pred_check
        %p491 = pneg %p490
      $region66: #{tpu_custom_call.1} parent=5 // pred_check_branch
        %493 = sbr.rel (%p491) target = $region68
      $region67: #{tpu_custom_call.1} parent=5 // pred_region
        // Predicated region
        $region69: #{tpu_custom_call.1} parent=67 // pred_check
          %p494 = pneg %p53
        $region70: #{tpu_custom_call.1} parent=67 // pred_check_branch
          %496 = sbr.rel (%p494) target = $region72
        $region71: #{tpu_custom_call.1} parent=67 // pred_region
          %p497 = scmp.lt.s32.totalorder %s33, 1
          %s498 = scalar_select %p497, %s33, 1
          %s499 = smul.addr %s498, 4
          %s500 = scalar_lea.vmem %s0, %s499
        $region72: #{tpu_custom_call.1} parent=67 // pred_fallthru
          _
      $region68: #{tpu_custom_call.1} parent=5 // pred_fallthru
        _
      %p501 = scmp.le.s32.totalorder 1, %s33
      %p502 = scmp.lt.s32.totalorder %s33, 3
      %p503 = pnand %p501, %p502
      %p504 = pneg %p503
      // Predicated region
      $region73: #{tpu_custom_call.1} parent=5 // pred_check
        _
      $region74: #{tpu_custom_call.1} parent=5 // pred_check_branch
        %506 = sbr.rel (%p503) target = $region76
      $region75: #{tpu_custom_call.1} parent=5 // pred_region
        %s507 = ssub.s32 %s33, 1
        %p508 = scmp.lt.s32.totalorder %s38, 1
        %s509 = scalar_select %p508, %s38, 1
        %s510 = smul.addr %s509, 4
        %s511 = scalar_lea.vmem %s0, %s510
        %p512 = pneg %p59
        %p513 = pneg %p56
        %p514 = pneg %p80
        %p515 = pneg %p77
        %p516 = pneg %p101
        %p517 = pneg %p98
        %p518 = pneg %p122
        %p519 = pneg %p119
        %p520 = pneg %p143
        %p521 = pneg %p140
        %p522 = pneg %p164
        %p523 = pneg %p161
        %p524 = pneg %p185
        %p525 = pneg %p182
        %p526 = pneg %p206
        %p527 = pneg %p203
        %p528 = pneg %p227
        %p529 = pneg %p224
        %p530 = pneg %p248
        %p531 = pneg %p245
        %p532 = pneg %p269
        %p533 = pneg %p266
        %p534 = pneg %p290
        %p535 = pneg %p287
        %p536 = pneg %p311
        %p537 = pneg %p308
        %p538 = pneg %p332
        %p539 = pneg %p329
        %p540 = pneg %p358
        %p541 = pneg %p355
        %s542 = sand.u32 %s345, 1
        %s543 = scalar_lea.sflag [#allocation3], %s542
        %s544 = sand.u32 %s345, 1
        %s545 = smul.addr %s544, 8
        %s546 = scalar_lea.vmem [#allocation2], %s545
        %p547 = pneg %p384
        %p548 = pneg %p381
        %s549 = sand.u32 %s38, 1
        %s550 = scalar_lea.sflag [#allocation5], %s549
        %s551 = sand.u32 %s371, 1
        %s552 = smul.addr %s551, 8
        %s553 = scalar_lea.vmem [#allocation4], %s552
        %p554 = pneg %p410
        %p555 = pneg %p407
        %s556 = sand.u32 %s38, 1
        %s557 = scalar_lea.sflag [#allocation5], %s556
        %s558 = sand.u32 %s397, 1
        %s559 = scalar_lea.vmem [#allocation6], %s558
        %p560 = pneg %p436
        %p561 = pneg %p433
        %s562 = sand.u32 %s423, 1
        %s563 = scalar_lea.sflag [#allocation8], %s562
        %s564 = sand.u32 %s423, 1
        %s565 = scalar_lea.vmem [#allocation7], %s564
        %p566 = scmp.lt.s32.totalorder %s38, 1
        %s567 = scalar_select %p566, %s38, 1
        %s568 = smul.addr %s567, 4
        %s569 = scalar_lea.vmem %s0, %s568
        %v571 = vld [vmem:[%s569] sm:$0xf]
        %v572 = vld [vmem:[%s1] sm:$0xf]
        %v573 = vld [vmem:[%s1 + $0x4] sm:$0xf]
        %v574 = vld [vmem:[%s1 + $0x8] sm:$0xf]
        %v575 = vld [vmem:[%s1 + $0xc] sm:$0xf]
        %v576 = vld [vmem:[%s1 + $0x10] sm:$0xf]
        %v577 = vld [vmem:[%s1 + $0x14] sm:$0xf]
        %v578 = vld [vmem:[%s1 + $0x18] sm:$0xf]
        %v579 = vld [vmem:[%s1 + $0x1c] sm:$0xf]
        %v580 = vld [vmem:[%s1 + $0x20] sm:$0xf]
        %v581 = vld [vmem:[%s1 + $0x24] sm:$0xf]
        %v582 = vld [vmem:[%s1 + $0x28] sm:$0xf]
        %v583 = vld [vmem:[%s1 + $0x2c] sm:$0xf]
        %v584 = vld [vmem:[%s1 + $0x30] sm:$0xf]
        %v585 = vld [vmem:[%s1 + $0x34] sm:$0xf]
        %v586 = vld [vmem:[%s1 + $0x38] sm:$0xf]
        %v587 = vld [vmem:[%s1 + $0x3c] sm:$0xf]
        %v588 = vld [vmem:[%s2] sm:$0x1]
        %v590 = vlaneseq
        %v591 = vshrl.u32 %v590, 7
        %v592 = vsub.s32 0, %v591
        %v593 = vrot.slane %v588, %v592
        %v611 = vunpack.c.l.b16 %v572
        %v612 = vunpack.c.l.b16 %v573
        %v613 = vunpack.c.l.b16 %v574
        %v614 = vunpack.c.l.b16 %v575
        %v615 = vunpack.c.l.b16 %v576
        %v616 = vunpack.c.l.b16 %v577
        %v617 = vunpack.c.l.b16 %v578
        %v618 = vunpack.c.l.b16 %v579
        %v619 = vunpack.c.l.b16 %v580
        %v620 = vunpack.c.l.b16 %v581
        %v621 = vunpack.c.l.b16 %v582
        %v622 = vunpack.c.l.b16 %v583
        %v623 = vunpack.c.l.b16 %v584
        %v624 = vunpack.c.l.b16 %v585
        %v625 = vunpack.c.l.b16 %v586
        %v626 = vunpack.c.l.b16 %v587
        %v627 = vpack.c.b16 %v612, %v611
        %v628 = vpack.c.b16 %v614, %v613
        %v629 = vpack.c.b16 %v616, %v615
        %v630 = vpack.c.b16 %v618, %v617
        %v631 = vpack.c.b16 %v620, %v619
        %v632 = vpack.c.b16 %v622, %v621
        %v633 = vpack.c.b16 %v624, %v623
        %v634 = vpack.c.b16 %v626, %v625
        %643 = vmatprep.subr.bf16.mxu0 0
        %644 = vmatpush1.bf16.msra.mxu0 %v627
        %645 = vmatprep.subr.bf16.mxu0 0
        %646 = vmatpush1.bf16.msra.mxu0 %v628
        %647 = vmatprep.subr.bf16.mxu0 0
        %648 = vmatpush1.bf16.msra.mxu0 %v629
        %649 = vmatprep.subr.bf16.mxu0 0
        %650 = vmatpush1.bf16.msra.mxu0 %v630
        %651 = vmatprep.subr.bf16.mxu0 0
        %652 = vmatpush1.bf16.msra.mxu0 %v631
        %653 = vmatprep.subr.bf16.mxu0 0
        %654 = vmatpush1.bf16.msra.mxu0 %v632
        %655 = vmatprep.subr.bf16.mxu0 0
        %656 = vmatpush1.bf16.msra.mxu0 %v633
        %657 = vmatprep.subr.bf16.mxu0 0
        %658 = vmatpush1.bf16.msra.mxu0 %v634
        %659 = vmatprep.subr.bf16.mxu0 0
        %660 = vmatpush1.bf16.msra.mxu0 0
        %661 = vmatprep.subr.bf16.mxu0 0
        %662 = vmatpush1.bf16.msra.mxu0 0
        %663 = vmatprep.subr.bf16.mxu0 0
        %664 = vmatpush1.bf16.msra.mxu0 0
        %665 = vmatprep.subr.bf16.mxu0 0
        %666 = vmatpush1.bf16.msra.mxu0 0
        %667 = vmatprep.subr.bf16.mxu0 0
        %668 = vmatpush1.bf16.msra.mxu0 0
        %669 = vmatprep.subr.bf16.mxu0 0
        %670 = vmatpush1.bf16.msra.mxu0 0
        %671 = vmatprep.subr.bf16.mxu0 0
        %672 = vmatpush1.bf16.msra.mxu0 0
        %673 = vmatprep.subr.bf16.mxu0 0
        %674 = vmatpush1.bf16.msra.mxu0 0
        %675 = vmatprep.mubr.bf16.mxu0 0
        %676 = vmatmul.mubr.bf16.gmra.mrb[0].mxu0 %v571
        %v677 = vpop.f32.mrb[0].mxu0
        %v678 = vadd.f32 %v593, %v677
        %v679 = vpop.f32.mrb[0].mxu0
        %v680 = vpop.f32.mrb[0].mxu0
        %v681 = vpop.f32.mrb[0].mxu0
        %682 = vdwg.mxu0
        %v683 = vmax.f32 %v678, 0.0
        %v684 = vld [vmem:[%s3] sm:$0xff]
        %v685 = vadd.f32 %v683, %v684
        %v686 = vlaneseq
        %v687 = vshrl.u32 %v686, 7
        %vm688 = vcmp.lt.s32.totalorder %v687, 0
        %v689 = vsub.s32 0, %v687
        %v690 = vsel %vm688, %v689, %v687
        %v691 = vshrl.u32 %v690, 3
        %v692 = vand.u32 %v690, 7
        %v693 = vsub.s32 0, %v692
        %v694 = vsel %vm688, %v693, %v692
        %vm695 = vcmp.ne.s32.totalorder %v694, 0
        %vm696 = vcmp.lt.s32.totalorder %v694, 0
        %vm697 = vmand %vm696, %vm695
        %v698 = vadd.s32 %v694, 8
        %v699 = vsel %vm697, %v698, %v694
        %vm700 = vcmp.eq.s32.totalorder %v699, 0
        %vm701 = vcmp.eq.s32.totalorder %v699, 7
        %v702 = vld [vmem:[%s4] sm:$0x1]
        %v703 = vld [vmem:[%s5] sm:$0x1]
        %vm704 = vcmask 261120
        %v705 = vsel %vm704, %v685, 0.0
        %706 = vadd.xlane.f32.xlu0 %v705
        %v707 = vpop.xlane.xlu0 %706
        %v708 = vrcp.pop 32.0
        %v709 = vmul.f32 %v707, %v708
        %v710 = vsub.f32 %v685, %v709
        %v711 = vmul.f32 %v710, %v710
        %v712 = vsel %vm704, %v711, 0.0
        %713 = vadd.xlane.f32.xlu0 %v712
        %v714 = vpop.xlane.xlu0 %713
        %v715 = vmul.f32 %v714, %v708
        %v716 = vadd.f32 %v715, 1e-06
        %v717 = vrsqrt.pop %v716
        %v718 = vmul.f32 %v710, %v717
        %v720 = vlaneseq
        %v721 = vshrl.u32 %v720, 7
        %v722 = vsub.s32 0, %v721
        %v723 = vrot.slane %v702, %v722
        %v725 = vmul.f32 %v718, %v723
        %v727 = vlaneseq
        %v728 = vshrl.u32 %v727, 7
        %v729 = vsub.s32 0, %v728
        %v730 = vrot.slane %v703, %v729
        %v732 = vadd.f32 %v725, %v730
        %v733 = vrot.slane %v732, 7
        %v734 = vsel %vm700, 1, 0
        %vm735 = vcmp.eq.s32.totalorder %v734, 1
        %v736 = vsel %vm735, 0.0, %v733
        %v737 = vpack.c.bf16 %v736, %v736
        %v738 = vrot.slane %v732, 1
        %v739 = vsel %vm701, 1, 0
        %vm740 = vcmp.eq.s32.totalorder %v739, 1
        %v741 = vsel %vm740, 0.0, %v738
        %v742 = vpack.c.bf16 %v741, %v741
        %v743 = vpack.c.bf16 %v732, %v732
        %745 = vrot.lane.b32.xlu0 %v743, 32
        %v746 = vpop.permute.xlu0 %745
        %748 = vrot.lane.b32.xlu0 %v742, 64
        %v749 = vpop.permute.xlu0 %748
        %v752 = vsel %vm704, %v737, %v746
        %vm753 = vcmask 523264
        %v755 = vsel %vm753, %v752, %v749
        %v756 = vld [vmem:[%s6] sm:$0xf]
        %v757 = vld [vmem:[%s6 + $0x4] sm:$0xf]
        %v758 = vld [vmem:[%s6 + $0x8] sm:$0xf]
        %v759 = vld [vmem:[%s6 + $0xc] sm:$0xf]
        %v760 = vld [vmem:[%s6 + $0x10] sm:$0xf]
        %v761 = vld [vmem:[%s6 + $0x14] sm:$0xf]
        %v762 = vld [vmem:[%s6 + $0x18] sm:$0xf]
        %v763 = vld [vmem:[%s6 + $0x1c] sm:$0xf]
        %v764 = vld [vmem:[%s6 + $0x20] sm:$0xf]
        %v765 = vld [vmem:[%s6 + $0x24] sm:$0xf]
        %v766 = vld [vmem:[%s6 + $0x28] sm:$0xf]
        %v767 = vld [vmem:[%s6 + $0x2c] sm:$0xf]
        %v768 = vld [vmem:[%s7] sm:$0x1]
        %v770 = vlaneseq
        %v771 = vshrl.u32 %v770, 7
        %v772 = vsub.s32 0, %v771
        %v773 = vrot.slane %v768, %v772
        %v787 = vunpack.c.l.b16 %v756
        %v788 = vunpack.c.l.b16 %v757
        %v789 = vunpack.c.l.b16 %v758
        %v790 = vunpack.c.l.b16 %v759
        %v791 = vunpack.c.l.b16 %v760
        %v792 = vunpack.c.l.b16 %v761
        %v793 = vunpack.c.l.b16 %v762
        %v794 = vunpack.c.l.b16 %v763
        %v795 = vunpack.c.l.b16 %v764
        %v796 = vunpack.c.l.b16 %v765
        %v797 = vunpack.c.l.b16 %v766
        %v798 = vunpack.c.l.b16 %v767
        %v799 = vpack.c.b16 %v788, %v787
        %v800 = vpack.c.b16 %v790, %v789
        %v801 = vpack.c.b16 %v792, %v791
        %v802 = vpack.c.b16 %v794, %v793
        %v803 = vpack.c.b16 %v796, %v795
        %v804 = vpack.c.b16 %v798, %v797
        %vm811 = vcmask 785408
        %v812 = vsel %vm811, %v755, 0
        %814 = vmatprep.subr.bf16.mxu0 0
        %815 = vmatpush1.bf16.msra.mxu0 %v799
        %816 = vmatprep.subr.bf16.mxu0 0
        %817 = vmatpush1.bf16.msra.mxu0 %v800
        %818 = vmatprep.subr.bf16.mxu0 0
        %819 = vmatpush1.bf16.msra.mxu0 %v801
        %820 = vmatprep.subr.bf16.mxu0 0
        %821 = vmatpush1.bf16.msra.mxu0 %v802
        %822 = vmatprep.subr.bf16.mxu0 0
        %823 = vmatpush1.bf16.msra.mxu0 %v803
        %824 = vmatprep.subr.bf16.mxu0 0
        %825 = vmatpush1.bf16.msra.mxu0 %v804
        %826 = vmatprep.subr.bf16.mxu0 0
        %827 = vmatpush1.bf16.msra.mxu0 0
        %828 = vmatprep.subr.bf16.mxu0 0
        %829 = vmatpush1.bf16.msra.mxu0 0
        %830 = vmatprep.subr.bf16.mxu0 0
        %831 = vmatpush1.bf16.msra.mxu0 0
        %832 = vmatprep.subr.bf16.mxu0 0
        %833 = vmatpush1.bf16.msra.mxu0 0
        %834 = vmatprep.subr.bf16.mxu0 0
        %835 = vmatpush1.bf16.msra.mxu0 0
        %836 = vmatprep.subr.bf16.mxu0 0
        %837 = vmatpush1.bf16.msra.mxu0 0
        %838 = vmatprep.subr.bf16.mxu0 0
        %839 = vmatpush1.bf16.msra.mxu0 0
        %840 = vmatprep.subr.bf16.mxu0 0
        %841 = vmatpush1.bf16.msra.mxu0 0
        %842 = vmatprep.subr.bf16.mxu0 0
        %843 = vmatpush1.bf16.msra.mxu0 0
        %844 = vmatprep.subr.bf16.mxu0 0
        %845 = vmatpush1.bf16.msra.mxu0 0
        %846 = vmatprep.mubr.bf16.mxu0 0
        %847 = vmatmul.mubr.bf16.gmra.mrb[0].mxu0 %v812
        %v848 = vpop.f32.mrb[0].mxu0
        %v849 = vadd.f32 %v773, %v848
        %v850 = vpop.f32.mrb[0].mxu0
        %v851 = vpop.f32.mrb[0].mxu0
        %v852 = vpop.f32.mrb[0].mxu0
        %853 = vdwg.mxu0
        %v854 = vmax.f32 %v849, 0.0
        %v855 = vpack.c.bf16 %v854, %v854
        %v856 = vld [vmem:[%s8] sm:$0xf]
        %v857 = vld [vmem:[%s8 + $0x4] sm:$0xf]
        %v858 = vld [vmem:[%s8 + $0x8] sm:$0xf]
        %v859 = vld [vmem:[%s8 + $0xc] sm:$0xf]
        %v860 = vld [vmem:[%s8 + $0x10] sm:$0xf]
        %v861 = vld [vmem:[%s8 + $0x14] sm:$0xf]
        %v862 = vld [vmem:[%s8 + $0x18] sm:$0xf]
        %v863 = vld [vmem:[%s8 + $0x1c] sm:$0xf]
        %v872 = vunpack.c.l.b16 %v856
        %v873 = vunpack.c.l.b16 %v857
        %v874 = vunpack.c.l.b16 %v858
        %v875 = vunpack.c.l.b16 %v859
        %v876 = vunpack.c.l.b16 %v860
        %v877 = vunpack.c.l.b16 %v861
        %v878 = vunpack.c.l.b16 %v862
        %v879 = vunpack.c.l.b16 %v863
        %v880 = vpack.c.b16 %v873, %v872
        %v881 = vpack.c.b16 %v875, %v874
        %v882 = vpack.c.b16 %v877, %v876
        %v883 = vpack.c.b16 %v879, %v878
        %v889 = vsel %vm753, %v855, 0
        %891 = vmatprep.subr.bf16.mxu0 0
        %892 = vmatpush1.bf16.msra.mxu0 %v880
        %893 = vmatprep.subr.bf16.mxu0 0
        %894 = vmatpush1.bf16.msra.mxu0 %v881
        %895 = vmatprep.subr.bf16.mxu0 0
        %896 = vmatpush1.bf16.msra.mxu0 %v882
        %897 = vmatprep.subr.bf16.mxu0 0
        %898 = vmatpush1.bf16.msra.mxu0 %v883
        %899 = vmatprep.subr.bf16.mxu0 0
        %900 = vmatpush1.bf16.msra.mxu0 0
        %901 = vmatprep.subr.bf16.mxu0 0
        %902 = vmatpush1.bf16.msra.mxu0 0
        %903 = vmatprep.subr.bf16.mxu0 0
        %904 = vmatpush1.bf16.msra.mxu0 0
        %905 = vmatprep.subr.bf16.mxu0 0
        %906 = vmatpush1.bf16.msra.mxu0 0
        %907 = vmatprep.subr.bf16.mxu0 0
        %908 = vmatpush1.bf16.msra.mxu0 0
        %909 = vmatprep.subr.bf16.mxu0 0
        %910 = vmatpush1.bf16.msra.mxu0 0
        %911 = vmatprep.subr.bf16.mxu0 0
        %912 = vmatpush1.bf16.msra.mxu0 0
        %913 = vmatprep.subr.bf16.mxu0 0
        %914 = vmatpush1.bf16.msra.mxu0 0
        %915 = vmatprep.subr.bf16.mxu0 0
        %916 = vmatpush1.bf16.msra.mxu0 0
        %917 = vmatprep.subr.bf16.mxu0 0
        %918 = vmatpush1.bf16.msra.mxu0 0
        %919 = vmatprep.subr.bf16.mxu0 0
        %920 = vmatpush1.bf16.msra.mxu0 0
        %921 = vmatprep.subr.bf16.mxu0 0
        %922 = vmatpush1.bf16.msra.mxu0 0
        %923 = vmatprep.mubr.bf16.mxu0 0
        %924 = vmatmul.mubr.bf16.gmra.mrb[0].mxu0 %v889
        %v925 = vpop.f32.mrb[0].mxu0
        %v926 = vadd.f32 0.0, %v925
        %v927 = vpop.f32.mrb[0].mxu0
        %v928 = vpop.f32.mrb[0].mxu0
        %v929 = vpop.f32.mrb[0].mxu0
        %930 = vdwg.mxu0
        %v931 = vrot.slane %v926, 7
        %v932 = vsel %vm735, 0.0, %v931
        %934 = vrot.lane.b32.xlu0 %v926, 96
        %v935 = vpop.permute.xlu0 %934
        %v937 = vadd.f32 %v932, %v935
        %938 = vrot.lane.b32.xlu0 %v926, 64
        %v939 = vpop.permute.xlu0 %938
        %v941 = vrot.slane %v939, 1
        %v942 = vsel %vm740, 0.0, %v941
        %v943 = vadd.f32 %v937, %v942
        %v944 = vld [vmem:[%s9] sm:$0x1]
        %v946 = vlaneseq
        %v947 = vshrl.u32 %v946, 7
        %v948 = vsub.s32 0, %v947
        %v949 = vrot.slane %v944, %v948
        %v951 = vadd.f32 %v943, %v949
        %v952 = vadd.f32 %v951, %v685
        %v953 = vld [vmem:[%s10] sm:$0x1]
        %v954 = vld [vmem:[%s11] sm:$0x1]
        %v955 = vsel %vm704, %v952, 0.0
        %956 = vadd.xlane.f32.xlu0 %v955
        %v957 = vpop.xlane.xlu0 %956
        %v958 = vmul.f32 %v957, %v708
        %v959 = vsub.f32 %v952, %v958
        %v960 = vmul.f32 %v959, %v959
        %v961 = vsel %vm704, %v960, 0.0
        %962 = vadd.xlane.f32.xlu0 %v961
        %v963 = vpop.xlane.xlu0 %962
        %v964 = vmul.f32 %v963, %v708
        %v965 = vadd.f32 %v964, 1e-06
        %v966 = vrsqrt.pop %v965
        %v967 = vmul.f32 %v959, %v966
        %v969 = vlaneseq
        %v970 = vshrl.u32 %v969, 7
        %v971 = vsub.s32 0, %v970
        %v972 = vrot.slane %v953, %v971
        %v974 = vmul.f32 %v967, %v972
        %v976 = vlaneseq
        %v977 = vshrl.u32 %v976, 7
        %v978 = vsub.s32 0, %v977
        %v979 = vrot.slane %v954, %v978
        %v981 = vadd.f32 %v974, %v979
        %982 = vst.msk [vmem:[%s546] sm:$0xff] %vm704, %v981
        %v983 = vmul.f32 %v981, %v981
        %v984 = vsel %vm704, %v983, 0.0
        %985 = vadd.xlane.f32.xlu0 %v984
        %v986 = vpop.xlane.xlu0 %985
        %v987 = vmax.f32 %v986, 1e-24
        %v988 = vrsqrt.pop %v987
        %v989 = vmul.f32 %v981, %v988
        %990 = vst.msk [vmem:[%s553] sm:$0xff] %vm704, %v989
        %v991 = vsel %vm704, %v981, 0.0
        %v992 = vrot.slane %v991, 4
        %v993 = vadd.f32 %v991, %v992
        %v994 = vrot.slane %v993, 2
        %v995 = vadd.f32 %v993, %v994
        %v996 = vrot.slane %v995, 1
        %v997 = vadd.f32 %v995, %v996
        %v998 = vmul.f32 %v997, 0.125
        %v999 = vpack.c.bf16 %v998, %v998
        %v1000 = vld [vmem:[%s12] sm:$0xf]
        %v1001 = vld [vmem:[%s12 + $0x4] sm:$0xf]
        %v1002 = vld [vmem:[%s12 + $0x8] sm:$0xf]
        %v1003 = vld [vmem:[%s12 + $0xc] sm:$0xf]
        %v1004 = vld [vmem:[%s13] sm:$0x1]
        %v1009 = vunpack.c.l.b16 %v1000
        %v1010 = vunpack.c.l.b16 %v1001
        %v1011 = vunpack.c.l.b16 %v1002
        %v1012 = vunpack.c.l.b16 %v1003
        %v1013 = vpack.c.b16 %v1010, %v1009
        %v1014 = vpack.c.b16 %v1012, %v1011
        %v1018 = vsel %vm704, %v999, 0
        %1020 = vmatprep.subr.bf16.mxu0 0
        %1021 = vmatpush1.bf16.msra.mxu0 %v1013
        %1022 = vmatprep.subr.bf16.mxu0 0
        %1023 = vmatpush1.bf16.msra.mxu0 %v1014
        %1024 = vmatprep.subr.bf16.mxu0 0
        %1025 = vmatpush1.bf16.msra.mxu0 0
        %1026 = vmatprep.subr.bf16.mxu0 0
        %1027 = vmatpush1.bf16.msra.mxu0 0
        %1028 = vmatprep.subr.bf16.mxu0 0
        %1029 = vmatpush1.bf16.msra.mxu0 0
        %1030 = vmatprep.subr.bf16.mxu0 0
        %1031 = vmatpush1.bf16.msra.mxu0 0
        %1032 = vmatprep.subr.bf16.mxu0 0
        %1033 = vmatpush1.bf16.msra.mxu0 0
        %1034 = vmatprep.subr.bf16.mxu0 0
        %1035 = vmatpush1.bf16.msra.mxu0 0
        %1036 = vmatprep.subr.bf16.mxu0 0
        %1037 = vmatpush1.bf16.msra.mxu0 0
        %1038 = vmatprep.subr.bf16.mxu0 0
        %1039 = vmatpush1.bf16.msra.mxu0 0
        %1040 = vmatprep.subr.bf16.mxu0 0
        %1041 = vmatpush1.bf16.msra.mxu0 0
        %1042 = vmatprep.subr.bf16.mxu0 0
        %1043 = vmatpush1.bf16.msra.mxu0 0
        %1044 = vmatprep.subr.bf16.mxu0 0
        %1045 = vmatpush1.bf16.msra.mxu0 0
        %1046 = vmatprep.subr.bf16.mxu0 0
        %1047 = vmatpush1.bf16.msra.mxu0 0
        %1048 = vmatprep.subr.bf16.mxu0 0
        %1049 = vmatpush1.bf16.msra.mxu0 0
        %1050 = vmatprep.subr.bf16.mxu0 0
        %1051 = vmatpush1.bf16.msra.mxu0 0
        %1052 = vmatprep.mubr.bf16.mxu0 0
        %1053 = vmatmul.mubr.bf16.gmra.mrb[0].mxu0 %v1018
        %v1054 = vpop.f32.mrb[0].mxu0
        %v1055 = vadd.f32 %v1004, %v1054
        %v1056 = vpop.f32.mrb[0].mxu0
        %v1057 = vpop.f32.mrb[0].mxu0
        %v1058 = vpop.f32.mrb[0].mxu0
        %1059 = vdwg.mxu0
        %1060 = vst [vmem:[%s559] sm:$0x1] %v1055
        %vm1061 = vcmask 1040384
        %v1062 = vsel %vm1061, %v1055, -inf
        %1063 = vmax.xlane.f32.xlu0 %v1062
        %v1064 = vpop.xlane.xlu0 %1063
        %v1065 = vsub.f32 %v1055, %v1064
        %v1066 = vmul.f32 %v1065, 1.442695
        %v1067 = vpow.pop %v1066
        %v1068 = vsel %vm1061, %v1067, 0.0
        %1069 = vadd.xlane.f32.xlu0 %v1068
        %v1070 = vpop.xlane.xlu0 %1069
        %v1071 = vrcp.pop %v1070
        %v1072 = vmul.f32 %v1067, %v1071
        %1073 = vst [vmem:[%s565] sm:$0x1] %v1072
        %s1074 = sand.u32 %s345, 1
        %s1075 = scalar_lea.sflag [#allocation3], %s1074
        %s1076 = sand.u32 %s345, 1
        %s1077 = smul.addr %s1076, 8
        %s1078 = scalar_lea.vmem [#allocation2], %s1077
        %s1079 = sand.u32 %s38, 1
        %s1080 = scalar_lea.sflag [#allocation5], %s1079
        %s1081 = sand.u32 %s371, 1
        %s1082 = smul.addr %s1081, 8
        %s1083 = scalar_lea.vmem [#allocation4], %s1082
        %s1084 = sand.u32 %s38, 1
        %s1085 = scalar_lea.sflag [#allocation5], %s1084
        %s1086 = sand.u32 %s397, 1
        %s1087 = scalar_lea.vmem [#allocation6], %s1086
        %s1088 = sand.u32 %s423, 1
        %s1089 = scalar_lea.sflag [#allocation8], %s1088
        %s1090 = sand.u32 %s423, 1
        %s1091 = scalar_lea.vmem [#allocation7], %s1090
        // Predicated region
        $region77: #{tpu_custom_call.1} parent=75 // pred_check
          %p1092 = pneg %p355
        $region78: #{tpu_custom_call.1} parent=75 // pred_check_branch
          %1094 = sbr.rel (%p1092) target = $region80
        $region79: #{tpu_custom_call.1} parent=75 // pred_region
          %s1096 = ssub.s32 128, 128
          %1097 = vsyncadd %s1075, %s1096
          %s1098 = smul.addr %s38, 128
          %s1099 = scalar_lea.hbm %s14, %s1098
          %s1101 = sshll.u32 %s1078, 4
          %s1102 = int_to_ptr.vmem [resolvable:$true] %s1101
          %1104 = dma.vmem_to_hbm [thread:$0]  %s1102, 128, %s1099, %s1075
        $region80: #{tpu_custom_call.1} parent=75 // pred_fallthru
          _
        // Predicated region
        $region81: #{tpu_custom_call.1} parent=75 // pred_check
          %p1105 = pneg %p381
        $region82: #{tpu_custom_call.1} parent=75 // pred_check_branch
          %1107 = sbr.rel (%p1105) target = $region84
        $region83: #{tpu_custom_call.1} parent=75 // pred_region
          %s1109 = ssub.s32 128, 128
          %1110 = vsyncadd %s1080, %s1109
          %s1111 = smul.addr %s38, 128
          %s1112 = scalar_lea.hbm %s15, %s1111
          %s1114 = sshll.u32 %s1083, 4
          %s1115 = int_to_ptr.vmem [resolvable:$true] %s1114
          %1117 = dma.vmem_to_hbm [thread:$0]  %s1115, 128, %s1112, %s1080
        $region84: #{tpu_custom_call.1} parent=75 // pred_fallthru
          _
        // Predicated region
        $region85: #{tpu_custom_call.1} parent=75 // pred_check
          %p1118 = pneg %p407
        $region86: #{tpu_custom_call.1} parent=75 // pred_check_branch
          %1120 = sbr.rel (%p1118) target = $region88
        $region87: #{tpu_custom_call.1} parent=75 // pred_region
          %s1122 = ssub.s32 16, 16
          %1123 = vsyncadd %s1085, %s1122
          %s1124 = smul.addr %s38, 16
          %s1125 = scalar_lea.hbm %s16, %s1124
          %s1127 = sshll.u32 %s1087, 4
          %s1128 = int_to_ptr.vmem [resolvable:$true] %s1127
          %1130 = dma.vmem_to_hbm [thread:$0]  %s1128, 16, %s1125, %s1085
        $region88: #{tpu_custom_call.1} parent=75 // pred_fallthru
          _
        // Predicated region
        $region89: #{tpu_custom_call.1} parent=75 // pred_check
          %p1131 = pneg %p433
        $region90: #{tpu_custom_call.1} parent=75 // pred_check_branch
          %1133 = sbr.rel (%p1131) target = $region92
        $region91: #{tpu_custom_call.1} parent=75 // pred_region
          %s1135 = ssub.s32 16, 16
          %1136 = vsyncadd %s1089, %s1135
          %s1137 = smul.addr %s38, 16
          %s1138 = scalar_lea.hbm %s17, %s1137
          %s1140 = sshll.u32 %s1091, 4
          %s1141 = int_to_ptr.vmem [resolvable:$true] %s1140
          %1143 = dma.vmem_to_hbm [thread:$0]  %s1141, 16, %s1138, %s1089
        $region92: #{tpu_custom_call.1} parent=75 // pred_fallthru
          _
      $region76: #{tpu_custom_call.1} parent=5 // pred_fallthru
        _
      %p1144 = scmp.le.s32.totalorder 2, %s33
      // Predicated region
      $region93: #{tpu_custom_call.1} parent=5 // pred_check
        %p1145 = pneg %p1144
      $region94: #{tpu_custom_call.1} parent=5 // pred_check_branch
        %1147 = sbr.rel (%p1145) target = $region96
      $region95: #{tpu_custom_call.1} parent=5 // pred_region
        %s1148 = ssub.s32 %s33, 2
        // Predicated region
        $region97: #{tpu_custom_call.1} parent=95 // pred_check
          %p1149 = pneg %p361
        $region98: #{tpu_custom_call.1} parent=95 // pred_check_branch
          %1151 = sbr.rel (%p1149) target = $region100
        $region99: #{tpu_custom_call.1} parent=95 // pred_region
          %s1152 = sand.u32 %s346, 1
          %s1153 = scalar_lea.sflag [#allocation3], %s1152
          %s1154 = sand.u32 %s346, 1
          %s1155 = smul.addr %s1154, 8
          %s1156 = scalar_lea.vmem [#allocation2], %s1155
          %1157 = dma.done %s1153, 128
        $region100: #{tpu_custom_call.1} parent=95 // pred_fallthru
          _
        // Predicated region
        $region101: #{tpu_custom_call.1} parent=95 // pred_check
          %p1158 = pneg %p387
        $region102: #{tpu_custom_call.1} parent=95 // pred_check_branch
          %1160 = sbr.rel (%p1158) target = $region104
        $region103: #{tpu_custom_call.1} parent=95 // pred_region
          %s1161 = sand.u32 %s39, 1
          %s1162 = scalar_lea.sflag [#allocation5], %s1161
          %s1163 = sand.u32 %s372, 1
          %s1164 = smul.addr %s1163, 8
          %s1165 = scalar_lea.vmem [#allocation4], %s1164
          %1166 = dma.done %s1162, 128
        $region104: #{tpu_custom_call.1} parent=95 // pred_fallthru
          _
        // Predicated region
        $region105: #{tpu_custom_call.1} parent=95 // pred_check
          %p1167 = pneg %p413
        $region106: #{tpu_custom_call.1} parent=95 // pred_check_branch
          %1169 = sbr.rel (%p1167) target = $region108
        $region107: #{tpu_custom_call.1} parent=95 // pred_region
          %s1170 = sand.u32 %s39, 1
          %s1171 = scalar_lea.sflag [#allocation5], %s1170
          %s1172 = sand.u32 %s398, 1
          %s1173 = scalar_lea.vmem [#allocation6], %s1172
          %1174 = dma.done %s1171, 16
        $region108: #{tpu_custom_call.1} parent=95 // pred_fallthru
          _
        // Predicated region
        $region109: #{tpu_custom_call.1} parent=95 // pred_check
          %p1175 = pneg %p439
        $region110: #{tpu_custom_call.1} parent=95 // pred_check_branch
          %1177 = sbr.rel (%p1175) target = $region112
        $region111: #{tpu_custom_call.1} parent=95 // pred_region
          %s1178 = sand.u32 %s424, 1
          %s1179 = scalar_lea.sflag [#allocation8], %s1178
          %s1180 = sand.u32 %s424, 1
          %s1181 = scalar_lea.vmem [#allocation7], %s1180
          %1182 = dma.done %s1179, 16
        $region112: #{tpu_custom_call.1} parent=95 // pred_fallthru
          _
      $region96: #{tpu_custom_call.1} parent=5 // pred_fallthru
        _
    $region6: #{tpu_custom_call.1} parent=1 // loop_footer
      %s37 = sadd.s32 1, %s33
    $region7: #{tpu_custom_call.1} parent=1 // loop_footer_branch
      %32 = sbr.rel target = $region3
    $region8: #{tpu_custom_call.1} parent=1 // loop_exit
      _
    %1183 = vsyncpa [#allocation3], 1
    %s1184 = scalar_lea.sflag [#allocation3], 1
    %1185 = vsyncpa %s1184, 1
    %1186 = vsyncpa [#allocation5], 1
    %s1187 = scalar_lea.sflag [#allocation5], 1
    %1188 = vsyncpa %s1187, 1
    %1189 = vsyncpa [#allocation8], 1
    %s1190 = scalar_lea.sflag [#allocation8], 1
    %1191 = vsyncpa %s1190, 1

</llo_original>
